<compile_context>
chip_gen: v7x
topology: tpu7x:2x2x1
jax: 0.10.0
libtpu: 0.0.40
codegen_flags: <defaults>
</compile_context>

<pallas_src>
from functools import partial

import jax
import jax.numpy as jnp
from jax import lax
from jax.experimental import pallas as pl
from jax.experimental.pallas import tpu as pltpu

_VMEM_LIMIT_BYTES = 32 * 1024 * 1024   # fits every chip's scoped/physical VMEM
_TARGET_TILE_BYTES = 6 * 1024 * 1024   # per input buffer (x2 for double buffering)
_SMALL_INPUT_BYTES = 1 * 1024 * 1024   # below this, plain XLA mean is faster


# ----------------------------- kernels ------------------------------------- #

def _accumulate(x_ref, acc_ref, *, s, s_total, ts, mask_s):
    """Add this token tile's partial sum (f32) into acc_ref."""
    x = x_ref[...]
    if mask_s:
        # Ragged token tail: zero out-of-range tokens before reducing.
        tok = s * ts + lax.broadcasted_iota(jnp.int32, x.shape, 1)
        x = jnp.where(tok < s_total, x, jnp.zeros_like(x))
    # dtype=f32 fuses the upcast into the reduction (no f32 tile materialized).
    acc_ref[...] += jnp.sum(x, axis=1, dtype=jnp.float32)


def _gap_kernel_f32(x_ref, o_ref, *, inv_s, s_total, ts, mask_s):
    """f32 output: accumulate directly into the resident output block."""
    s = pl.program_id(2)

    @pl.when(s == 0)
    def _init():
        o_ref[...] = jnp.zeros_like(o_ref)

    _accumulate(x_ref, o_ref, s=s, s_total=s_total, ts=ts, mask_s=mask_s)

    @pl.when(s == pl.num_programs(2) - 1)
    def _finalize():
        o_ref[...] *= inv_s


def _gap_kernel_acc(x_ref, o_ref, acc_ref, *, inv_s, s_total, ts, mask_s):
    """Sub-f32 output: f32 VMEM scratch accumulator, cast on the last step."""
    s = pl.program_id(2)

    @pl.when(s == 0)
    def _init():
        acc_ref[...] = jnp.zeros_like(acc_ref)

    _accumulate(x_ref, acc_ref, s=s, s_total=s_total, ts=ts, mask_s=mask_s)

    @pl.when(s == pl.num_programs(2) - 1)
    def _finalize():
        o_ref[...] = (acc_ref[...] * inv_s).astype(o_ref.dtype)


# ----------------------------- tiling -------------------------------------- #

def _tensorcores_per_chip() -> int:
    """Best-effort TensorCores-per-chip query (2 on v7x); defaults to 1."""
    try:
        info = pltpu.get_tpu_info()
        for name in ("num_cores", "core_count", "num_tensorcores",
                     "tensorcores_per_chip", "num_tensor_cores"):
            v = getattr(info, name, None)
            if isinstance(v, int) and v > 0:
                return v
    except Exception:
        pass
    return 1


def _choose_tiles(B, S, C, itemsize, n_tc):
    """Pick (TB, TS, TC) + grid sizes. (8,128)-legal, ~6 MiB input tiles."""
    # Batch tile: multiple of 8 (output-block sublane rule) or full B.
    if B <= 8:
        TB = B
    elif itemsize < 4 and B % 16 == 0 and B >= 32:
        TB = 16          # fill packed (bf16) output vregs when batch allows it
    else:
        TB = 8
    nb = pl.cdiv(B, TB)

    # Channel tile: keep full C (contiguous DMAs) unless a dual-TC chip needs a
    # second parallel block (and batch can't supply it), or VMEM forces a split.
    TC = C
    if C % 128 == 0:
        if n_tc > 1 and nb < 2 and C % 256 == 0:
            TC = C // 2
        while TB * 8 * TC * itemsize > _TARGET_TILE_BYTES and TC % 256 == 0:
            TC //= 2
    nc = pl.cdiv(C, TC)

    # Token tile: as large as the budget allows, multiple of 8; ragged tail is
    # masked in-kernel (no giant single-block fallback).
    ts = _TARGET_TILE_BYTES // max(1, TB * TC * itemsize)
    ts = max(8, (ts // 8) * 8)
    TS = S if ts >= S else ts
    ns = pl.cdiv(S, TS)
    mask_s = (S % TS) != 0
    return TB, TS, TC, nb, nc, ns, mask_s


# ----------------------------- wrappers ------------------------------------ #

def _gap_3d(x: jax.Array) -> jax.Array:
    """Mean over axis 1 of (B, S, C) via pallas_call."""
    B, S, C = x.shape
    itemsize = jnp.dtype(x.dtype).itemsize
    TB, TS, TC, nb, nc, ns, mask_s = _choose_tiles(
        B, S, C, itemsize, _tensorcores_per_chip())
    grid = (nb, nc, ns)
    common = dict(inv_s=1.0 / S, s_total=S, ts=TS, mask_s=mask_s)

    if jnp.dtype(x.dtype) == jnp.float32:
        kernel = partial(_gap_kernel_f32, **common)
        scratch = []
    else:
        kernel = partial(_gap_kernel_acc, **common)
        scratch = [pltpu.VMEM((TB, TC), jnp.float32)]

    return pl.pallas_call(
        kernel,
        out_shape=jax.ShapeDtypeStruct((B, C), x.dtype),
        grid=grid,
        in_specs=[pl.BlockSpec((TB, TS, TC), lambda b, c, s: (b, s, c))],
        # Output block ignores s -> stays resident across the whole reduction.
        out_specs=pl.BlockSpec((TB, TC), lambda b, c, s: (b, c)),
        scratch_shapes=scratch,
        compiler_params=pltpu.CompilerParams(
            dimension_semantics=("parallel", "parallel", "arbitrary"),
            vmem_limit_bytes=_VMEM_LIMIT_BYTES,
        ),
    )(x)


def global_average_pooling(x: jax.Array, dim: int = 1) -> jax.Array:
    """torch `x.mean(dim=dim)` (GlobalAveragePooling.forward)."""
    dim = dim % x.ndim
    out_shape = x.shape[:dim] + x.shape[dim + 1:]

    b = 1
    for d in x.shape[:dim]:
        b *= d
    c = 1
    for d in x.shape[dim + 1:]:
        c *= d
    s = x.shape[dim]

    itemsize = jnp.dtype(x.dtype).itemsize
    total_bytes = x.size * itemsize
    min_tc = 128 if (c % 128 == 0 and c >= 128) else c
    min_tile = 8 * 8 * min_tc * itemsize

    # XLA fallback: tiny inputs (fixed kernel-launch/DMA cost dominates),
    # lane-sparse C (<128), non-f32-storable/non-float dtypes, or pathological
    # unsplittable channel widths that cannot fit the VMEM budget.
    if (not jnp.issubdtype(x.dtype, jnp.floating)
            or itemsize > 4
            or s == 0
            or total_bytes < _SMALL_INPUT_BYTES
            or c < 128
            or 2 * min_tile > _VMEM_LIMIT_BYTES // 2):
        return jnp.mean(x, axis=dim)

    # Collapse leading dims -> B, trailing dims -> C (pure reshape, no transpose).
    x3 = x.reshape(b, s, c)
    out = _gap_3d(x3)
    return out.reshape(out_shape)


# ----------------------------- tests ---------------------------------------- #

if __name__ == "__main__":
    key = jax.random.PRNGKey(0)
    k1, k2, k3 = jax.random.split(key, 3)

    # 1) Tiny MLP-Mixer-like shape (takes the small-input XLA fallback path).
    B, S, C = 2, 8, 32
    x = jax.random.normal(k1, (B, S, C), dtype=jnp.float32)
    out = jax.block_until_ready(global_average_pooling(x))
    ref = jnp.mean(x, axis=1)
    assert out.shape == (B, C)
    assert jnp.allclose(out, ref, atol=1e-5, rtol=1e-5)

    # 2) f32 Pallas path: direct accumulation into the resident output block.
    B2, S2, C2 = 8, 512, 256
    x2 = jax.random.normal(k2, (B2, S2, C2), dtype=jnp.float32)
    out2 = jax.block_until_ready(global_average_pooling(x2))
    ref2 = jnp.mean(x2, axis=1)
    assert out2.shape == (B2, C2)
    assert jnp.allclose(out2, ref2, atol=1e-4, rtol=1e-4)

    # 3) bf16 Pallas path: f32 scratch accumulator, multiple batch blocks, and a
    #    ragged token axis (S % TS != 0) exercising the in-kernel iota mask.
    B3, S3, C3 = 16, 1000, 768
    x3 = jax.random.normal(k3, (B3, S3, C3), dtype=jnp.bfloat16)
    out3 = jax.block_until_ready(global_average_pooling(x3))
    ref3 = jnp.mean(x3.astype(jnp.float32), axis=1).astype(jnp.bfloat16)
    assert out3.shape == (B3, C3)
    assert jnp.allclose(out3.astype(jnp.float32), ref3.astype(jnp.float32),
                        atol=2e-2, rtol=2e-2)

    print("KERNEL_OK")
</pallas_src>

<mosaic_0001>
module attributes {stable_mosaic.version = 11 : i64} {
  func.func @_gap_kernel_f32(%arg0: i32, %arg1: i32, %arg2: i32, %arg3: memref<8x512x256xf32, #tpu.memory_space<vmem>>, %arg4: memref<8x256xf32, #tpu.memory_space<vmem>>) attributes {dimension_semantics = [#tpu.dimension_semantics<parallel>, #tpu.dimension_semantics<parallel>, #tpu.dimension_semantics<arbitrary>], iteration_bounds = array<i64: 1, 1, 1>, scalar_prefetch = 0 : i64, scratch_operands = 0 : i64, tpu.core_type = #tpu.core_type<tc>, window_params = [{transform_indices = @transform_0, window_bounds = array<i64: 8, 512, 256>}, {transform_indices = @transform_1, window_bounds = array<i64: 8, 256>}]} {
    %c0_i32 = arith.constant 0 : i32
    %0 = arith.cmpi eq, %arg2, %c0_i32 : i32
    %1 = arith.extui %0 : i1 to i32
    %c0_i32_0 = arith.constant 0 : i32
    %2 = arith.cmpi ne, %1, %c0_i32_0 : i32
    scf.if %2 {
      %cst_9 = arith.constant 0.000000e+00 : f32
      %11 = vector.broadcast %cst_9 : f32 to vector<8x256xf32>
      %c0_10 = arith.constant 0 : index
      %c0_11 = arith.constant 0 : index
      %12 = vector.load %arg4[%c0_10, %c0_11] : memref<8x256xf32, #tpu.memory_space<vmem>>, vector<8x256xf32>
      tpu.vector_store %arg4[%c0_10, %c0_11], %11 {strides = array<i32>} : memref<8x256xf32, #tpu.memory_space<vmem>>, vector<8x256xf32>,
    } else {
    }
    %c0 = arith.constant 0 : index
    %c0_1 = arith.constant 0 : index
    %c0_2 = arith.constant 0 : index
    %3 = vector.load %arg3[%c0, %c0_1, %c0_2] : memref<8x512x256xf32, #tpu.memory_space<vmem>>, vector<8x512x256xf32>
    %c0_3 = arith.constant 0 : index
    %c0_4 = arith.constant 0 : index
    %4 = vector.load %arg4[%c0_3, %c0_4] : memref<8x256xf32, #tpu.memory_space<vmem>>, vector<8x256xf32>
    %cst = arith.constant dense<0.000000e+00> : vector<8x256xf32>
    %5 = vector.multi_reduction <add>, %3, %cst [1] : vector<8x512x256xf32> to vector<8x256xf32>
    %6 = arith.addf %4, %5 : vector<8x256xf32>
    %c0_5 = arith.constant 0 : index
    %c0_6 = arith.constant 0 : index
    %7 = vector.load %arg4[%c0_5, %c0_6] : memref<8x256xf32, #tpu.memory_space<vmem>>, vector<8x256xf32>
    tpu.vector_store %arg4[%c0_5, %c0_6], %6 {strides = array<i32>} : memref<8x256xf32, #tpu.memory_space<vmem>>, vector<8x256xf32>,
    %c0_i32_7 = arith.constant 0 : i32
    %8 = arith.cmpi eq, %arg2, %c0_i32_7 : i32
    %9 = arith.extui %8 : i1 to i32
    %c0_i32_8 = arith.constant 0 : i32
    %10 = arith.cmpi ne, %9, %c0_i32_8 : i32
    scf.if %10 {
      %c0_9 = arith.constant 0 : index
      %c0_10 = arith.constant 0 : index
      %11 = vector.load %arg4[%c0_9, %c0_10] : memref<8x256xf32, #tpu.memory_space<vmem>>, vector<8x256xf32>
      %cst_11 = arith.constant 0.001953125 : f32
      %12 = vector.broadcast %cst_11 : f32 to vector<8x256xf32>
      %13 = arith.mulf %11, %12 : vector<8x256xf32>
      %c0_12 = arith.constant 0 : index
      %c0_13 = arith.constant 0 : index
      %14 = vector.load %arg4[%c0_12, %c0_13] : memref<8x256xf32, #tpu.memory_space<vmem>>, vector<8x256xf32>
      tpu.vector_store %arg4[%c0_12, %c0_13], %13 {strides = array<i32>} : memref<8x256xf32, #tpu.memory_space<vmem>>, vector<8x256xf32>,
    } else {
    }
    return
  }
  func.func @transform_0(%arg0: i32, %arg1: i32, %arg2: i32) -> (i32, i32, i32) {
    %c0_i32 = arith.constant 0 : i32
    return %arg0, %arg2, %arg1 : i32, i32, i32
  }
  func.func @transform_1(%arg0: i32, %arg1: i32, %arg2: i32) -> (i32, i32) {
    %c0_i32 = arith.constant 0 : i32
    return %arg0, %arg1 : i32, i32
  }
}

</mosaic_0001>

<llo_original>
// kernel: tpu_custom_call.1
$region0: #{tpu_custom_call.1}
  #allocation0 [shape = 'u32[]', space=smem, size = 0x4, offset = 0x4, fixed_abs, tag = 'smem constant byte address 0x4 - core index']
  #allocation1 [shape = 'u32[144,128]{1,0:T(1,128)}', space=vmem, size = 0x12000, scoped, tag = 'internal scratch']
  %s0 = inlined_call_operand.hbm [shape: f32[8,512,256], index: 0, kind: input, shape index: {}]
  %s1 = inlined_call_operand.hbm [shape: f32[8,256], index: 1, kind: output, shape index: {}]
  %s2 = sld [smem:[#allocation0]]
  $region26: #{tpu_custom_call.1} parent=0
    _
  %s4 = ssub.s32 1, %s2
  %s5 = scalar_select 0, %s4, %s2
  $region1: #{tpu_custom_call.1} parent=0
    #allocation2 [shape = 'u8[4194304]{0}', space=vmem, size = 0x400000, scoped, tag = 'input window, operand 0, single buffered']
    #allocation3 [shape = 's32[1]{0}', space=sflag, size = 0x4, scoped, tag = 'scoped memory for tpu_custom_call.1']
    #allocation4 [shape = 's32[1]{0}', space=sflag, size = 0x4, scoped, tag = 'scoped memory for tpu_custom_call.1']
    #allocation5 [shape = 'u8[8192]{0}', space=vmem, size = 0x2000, scoped, tag = 'output window, operand 0, single buffered']
    %6 = vsyncpa [#allocation3], 0
    %7 = vsyncpa [#allocation4], 0
    // Predicated region
    $region2: #{tpu_custom_call.1} parent=1 // pred_check
      _
    $region3: #{tpu_custom_call.1} parent=1 // pred_check_branch
      %9 = sbr.rel (0) target = $region5
    $region4: #{tpu_custom_call.1} parent=1 // pred_region
      %s11 = ssub.s32 131072, 131072
      %12 = vsyncadd [#allocation3], %s11
      %s13 = sshll.u32 [#allocation2], 4
      %s14 = int_to_ptr.vmem [resolvable:$true] %s13
      %19 = dma.hbm_to_vmem [thread:$0]  %s0, 131072, %s14, [#allocation3], 256, 256, 16
    $region5: #{tpu_custom_call.1} parent=1 // pred_fallthru
      _
    // Predicated region
    $region6: #{tpu_custom_call.1} parent=1 // pred_check
      _
    $region7: #{tpu_custom_call.1} parent=1 // pred_check_branch
      %21 = sbr.rel (0) target = $region9
    $region8: #{tpu_custom_call.1} parent=1 // pred_region
      %22 = dma.done [#allocation3], 131072
    $region9: #{tpu_custom_call.1} parent=1 // pred_fallthru
      _
    %p23 = scmp.eq.s32.totalorder 0, 0
    // Predicated region
    $region10: #{tpu_custom_call.1} parent=1 // pred_check
      %p24 = pneg %p23
    $region11: #{tpu_custom_call.1} parent=1 // pred_check_branch
      %26 = sbr.rel (%p24) target = $region13
    $region12: #{tpu_custom_call.1} parent=1 // pred_region
      %27 = vst [vmem:[#allocation5] sm:$0xff] 0.0
      %28 = vst [vmem:[#allocation5 + $0x8] sm:$0xff] 0.0
    $region13: #{tpu_custom_call.1} parent=1 // pred_fallthru
      _
    %v29 = vld [vmem:[#allocation2] sm:$0xff]
    %v30 = vld [vmem:[#allocation2 + $0x8] sm:$0xff]
    %v31 = vld [vmem:[#allocation2 + $0x10] sm:$0xff]
    %v32 = vld [vmem:[#allocation2 + $0x18] sm:$0xff]
    %v33 = vld [vmem:[#allocation2 + $0x20] sm:$0xff]
    %v34 = vld [vmem:[#allocation2 + $0x28] sm:$0xff]
    %v35 = vld [vmem:[#allocation2 + $0x30] sm:$0xff]
    %v36 = vld [vmem:[#allocation2 + $0x38] sm:$0xff]
    %v37 = vld [vmem:[#allocation2 + $0x40] sm:$0xff]
    %v38 = vld [vmem:[#allocation2 + $0x48] sm:$0xff]
    %v39 = vld [vmem:[#allocation2 + $0x50] sm:$0xff]
    %v40 = vld [vmem:[#allocation2 + $0x58] sm:$0xff]
    %v41 = vld [vmem:[#allocation2 + $0x60] sm:$0xff]
    %v42 = vld [vmem:[#allocation2 + $0x68] sm:$0xff]
    %v43 = vld [vmem:[#allocation2 + $0x70] sm:$0xff]
    %v44 = vld [vmem:[#allocation2 + $0x78] sm:$0xff]
    %v45 = vld [vmem:[#allocation2 + $0x80] sm:$0xff]
    %v46 = vld [vmem:[#allocation2 + $0x88] sm:$0xff]
    %v47 = vld [vmem:[#allocation2 + $0x90] sm:$0xff]
    %v48 = vld [vmem:[#allocation2 + $0x98] sm:$0xff]
    %v49 = vld [vmem:[#allocation2 + $0xa0] sm:$0xff]
    %v50 = vld [vmem:[#allocation2 + $0xa8] sm:$0xff]
    %v51 = vld [vmem:[#allocation2 + $0xb0] sm:$0xff]
    %v52 = vld [vmem:[#allocation2 + $0xb8] sm:$0xff]
    %v53 = vld [vmem:[#allocation2 + $0xc0] sm:$0xff]
    %v54 = vld [vmem:[#allocation2 + $0xc8] sm:$0xff]
    %v55 = vld [vmem:[#allocation2 + $0xd0] sm:$0xff]
    %v56 = vld [vmem:[#allocation2 + $0xd8] sm:$0xff]
    %v57 = vld [vmem:[#allocation2 + $0xe0] sm:$0xff]
    %v58 = vld [vmem:[#allocation2 + $0xe8] sm:$0xff]
    %v59 = vld [vmem:[#allocation2 + $0xf0] sm:$0xff]
    %v60 = vld [vmem:[#allocation2 + $0xf8] sm:$0xff]
    %v61 = vld [vmem:[#allocation2 + $0x100] sm:$0xff]
    %v62 = vld [vmem:[#allocation2 + $0x108] sm:$0xff]
    %v63 = vld [vmem:[#allocation2 + $0x110] sm:$0xff]
    %v64 = vld [vmem:[#allocation2 + $0x118] sm:$0xff]
    %v65 = vld [vmem:[#allocation2 + $0x120] sm:$0xff]
    %v66 = vld [vmem:[#allocation2 + $0x128] sm:$0xff]
    %v67 = vld [vmem:[#allocation2 + $0x130] sm:$0xff]
    %v68 = vld [vmem:[#allocation2 + $0x138] sm:$0xff]
    %v69 = vld [vmem:[#allocation2 + $0x140] sm:$0xff]
    %v70 = vld [vmem:[#allocation2 + $0x148] sm:$0xff]
    %v71 = vld [vmem:[#allocation2 + $0x150] sm:$0xff]
    %v72 = vld [vmem:[#allocation2 + $0x158] sm:$0xff]
    %v73 = vld [vmem:[#allocation2 + $0x160] sm:$0xff]
    %v74 = vld [vmem:[#allocation2 + $0x168] sm:$0xff]
    %v75 = vld [vmem:[#allocation2 + $0x170] sm:$0xff]
    %v76 = vld [vmem:[#allocation2 + $0x178] sm:$0xff]
    %v77 = vld [vmem:[#allocation2 + $0x180] sm:$0xff]
    %v78 = vld [vmem:[#allocation2 + $0x188] sm:$0xff]
    %v79 = vld [vmem:[#allocation2 + $0x190] sm:$0xff]
    %v80 = vld [vmem:[#allocation2 + $0x198] sm:$0xff]
    %v81 = vld [vmem:[#allocation2 + $0x1a0] sm:$0xff]
    %v82 = vld [vmem:[#allocation2 + $0x1a8] sm:$0xff]
    %v83 = vld [vmem:[#allocation2 + $0x1b0] sm:$0xff]
    %v84 = vld [vmem:[#allocation2 + $0x1b8] sm:$0xff]
    %v85 = vld [vmem:[#allocation2 + $0x1c0] sm:$0xff]
    %v86 = vld [vmem:[#allocation2 + $0x1c8] sm:$0xff]
    %v87 = vld [vmem:[#allocation2 + $0x1d0] sm:$0xff]
    %v88 = vld [vmem:[#allocation2 + $0x1d8] sm:$0xff]
    %v89 = vld [vmem:[#allocation2 + $0x1e0] sm:$0xff]
    %v90 = vld [vmem:[#allocation2 + $0x1e8] sm:$0xff]
    %v91 = vld [vmem:[#allocation2 + $0x1f0] sm:$0xff]
    %v92 = vld [vmem:[#allocation2 + $0x1f8] sm:$0xff]
    %v93 = vld [vmem:[#allocation2 + $0x200] sm:$0xff]
    %v94 = vld [vmem:[#allocation2 + $0x208] sm:$0xff]
    %v95 = vld [vmem:[#allocation2 + $0x210] sm:$0xff]
    %v96 = vld [vmem:[#allocation2 + $0x218] sm:$0xff]
    %v97 = vld [vmem:[#allocation2 + $0x220] sm:$0xff]
    %v98 = vld [vmem:[#allocation2 + $0x228] sm:$0xff]
    %v99 = vld [vmem:[#allocation2 + $0x230] sm:$0xff]
    %v100 = vld [vmem:[#allocation2 + $0x238] sm:$0xff]
    %v101 = vld [vmem:[#allocation2 + $0x240] sm:$0xff]
    %v102 = vld [vmem:[#allocation2 + $0x248] sm:$0xff]
    %v103 = vld [vmem:[#allocation2 + $0x250] sm:$0xff]
    %v104 = vld [vmem:[#allocation2 + $0x258] sm:$0xff]
    %v105 = vld [vmem:[#allocation2 + $0x260] sm:$0xff]
    %v106 = vld [vmem:[#allocation2 + $0x268] sm:$0xff]
    %v107 = vld [vmem:[#allocation2 + $0x270] sm:$0xff]
    %v108 = vld [vmem:[#allocation2 + $0x278] sm:$0xff]
    %v109 = vld [vmem:[#allocation2 + $0x280] sm:$0xff]
    %v110 = vld [vmem:[#allocation2 + $0x288] sm:$0xff]
    %v111 = vld [vmem:[#allocation2 + $0x290] sm:$0xff]
    %v112 = vld [vmem:[#allocation2 + $0x298] sm:$0xff]
    %v113 = vld [vmem:[#allocation2 + $0x2a0] sm:$0xff]
    %v114 = vld [vmem:[#allocation2 + $0x2a8] sm:$0xff]
    %v115 = vld [vmem:[#allocation2 + $0x2b0] sm:$0xff]
    %v116 = vld [vmem:[#allocation2 + $0x2b8] sm:$0xff]
    %v117 = vld [vmem:[#allocation2 + $0x2c0] sm:$0xff]
    %v118 = vld [vmem:[#allocation2 + $0x2c8] sm:$0xff]
    %v119 = vld [vmem:[#allocation2 + $0x2d0] sm:$0xff]
    %v120 = vld [vmem:[#allocation2 + $0x2d8] sm:$0xff]
    %v121 = vld [vmem:[#allocation2 + $0x2e0] sm:$0xff]
    %v122 = vld [vmem:[#allocation2 + $0x2e8] sm:$0xff]
    %v123 = vld [vmem:[#allocation2 + $0x2f0] sm:$0xff]
    %v124 = vld [vmem:[#allocation2 + $0x2f8] sm:$0xff]
    %v125 = vld [vmem:[#allocation2 + $0x300] sm:$0xff]
    %v126 = vld [vmem:[#allocation2 + $0x308] sm:$0xff]
    %v127 = vld [vmem:[#allocation2 + $0x310] sm:$0xff]
    %v128 = vld [vmem:[#allocation2 + $0x318] sm:$0xff]
    %v129 = vld [vmem:[#allocation2 + $0x320] sm:$0xff]
    %v130 = vld [vmem:[#allocation2 + $0x328] sm:$0xff]
    %v131 = vld [vmem:[#allocation2 + $0x330] sm:$0xff]
    %v132 = vld [vmem:[#allocation2 + $0x338] sm:$0xff]
    %v133 = vld [vmem:[#allocation2 + $0x340] sm:$0xff]
    %v134 = vld [vmem:[#allocation2 + $0x348] sm:$0xff]
    %v135 = vld [vmem:[#allocation2 + $0x350] sm:$0xff]
    %v136 = vld [vmem:[#allocation2 + $0x358] sm:$0xff]
    %v137 = vld [vmem:[#allocation2 + $0x360] sm:$0xff]
    %v138 = vld [vmem:[#allocation2 + $0x368] sm:$0xff]
    %v139 = vld [vmem:[#allocation2 + $0x370] sm:$0xff]
    %v140 = vld [vmem:[#allocation2 + $0x378] sm:$0xff]
    %v141 = vld [vmem:[#allocation2 + $0x380] sm:$0xff]
    %v142 = vld [vmem:[#allocation2 + $0x388] sm:$0xff]
    %v143 = vld [vmem:[#allocation2 + $0x390] sm:$0xff]
    %v144 = vld [vmem:[#allocation2 + $0x398] sm:$0xff]
    %v145 = vld [vmem:[#allocation2 + $0x3a0] sm:$0xff]
    %v146 = vld [vmem:[#allocation2 + $0x3a8] sm:$0xff]
    %v147 = vld [vmem:[#allocation2 + $0x3b0] sm:$0xff]
    %v148 = vld [vmem:[#allocation2 + $0x3b8] sm:$0xff]
    %v149 = vld [vmem:[#allocation2 + $0x3c0] sm:$0xff]
    %v150 = vld [vmem:[#allocation2 + $0x3c8] sm:$0xff]
    %v151 = vld [vmem:[#allocation2 + $0x3d0] sm:$0xff]
    %v152 = vld [vmem:[#allocation2 + $0x3d8] sm:$0xff]
    %v153 = vld [vmem:[#allocation2 + $0x3e0] sm:$0xff]
    %v154 = vld [vmem:[#allocation2 + $0x3e8] sm:$0xff]
    %v155 = vld [vmem:[#allocation2 + $0x3f0] sm:$0xff]
    %v156 = vld [vmem:[#allocation2 + $0x3f8] sm:$0xff]
    %v157 = vld [vmem:[#allocation2 + $0x400] sm:$0xff]
    %v158 = vld [vmem:[#allocation2 + $0x408] sm:$0xff]
    %v159 = vld [vmem:[#allocation2 + $0x410] sm:$0xff]
    %v160 = vld [vmem:[#allocation2 + $0x418] sm:$0xff]
    %v161 = vld [vmem:[#allocation2 + $0x420] sm:$0xff]
    %v162 = vld [vmem:[#allocation2 + $0x428] sm:$0xff]
    %v163 = vld [vmem:[#allocation2 + $0x430] sm:$0xff]
    %v164 = vld [vmem:[#allocation2 + $0x438] sm:$0xff]
    %v165 = vld [vmem:[#allocation2 + $0x440] sm:$0xff]
    %v166 = vld [vmem:[#allocation2 + $0x448] sm:$0xff]
    %v167 = vld [vmem:[#allocation2 + $0x450] sm:$0xff]
    %v168 = vld [vmem:[#allocation2 + $0x458] sm:$0xff]
    %v169 = vld [vmem:[#allocation2 + $0x460] sm:$0xff]
    %v170 = vld [vmem:[#allocation2 + $0x468] sm:$0xff]
    %v171 = vld [vmem:[#allocation2 + $0x470] sm:$0xff]
    %v172 = vld [vmem:[#allocation2 + $0x478] sm:$0xff]
    %v173 = vld [vmem:[#allocation2 + $0x480] sm:$0xff]
    %v174 = vld [vmem:[#allocation2 + $0x488] sm:$0xff]
    %v175 = vld [vmem:[#allocation2 + $0x490] sm:$0xff]
    %v176 = vld [vmem:[#allocation2 + $0x498] sm:$0xff]
    %v177 = vld [vmem:[#allocation2 + $0x4a0] sm:$0xff]
    %v178 = vld [vmem:[#allocation2 + $0x4a8] sm:$0xff]
    %v179 = vld [vmem:[#allocation2 + $0x4b0] sm:$0xff]
    %v180 = vld [vmem:[#allocation2 + $0x4b8] sm:$0xff]
    %v181 = vld [vmem:[#allocation2 + $0x4c0] sm:$0xff]
    %v182 = vld [vmem:[#allocation2 + $0x4c8] sm:$0xff]
    %v183 = vld [vmem:[#allocation2 + $0x4d0] sm:$0xff]
    %v184 = vld [vmem:[#allocation2 + $0x4d8] sm:$0xff]
    %v185 = vld [vmem:[#allocation2 + $0x4e0] sm:$0xff]
    %v186 = vld [vmem:[#allocation2 + $0x4e8] sm:$0xff]
    %v187 = vld [vmem:[#allocation2 + $0x4f0] sm:$0xff]
    %v188 = vld [vmem:[#allocation2 + $0x4f8] sm:$0xff]
    %v189 = vld [vmem:[#allocation2 + $0x500] sm:$0xff]
    %v190 = vld [vmem:[#allocation2 + $0x508] sm:$0xff]
    %v191 = vld [vmem:[#allocation2 + $0x510] sm:$0xff]
    %v192 = vld [vmem:[#allocation2 + $0x518] sm:$0xff]
    %v193 = vld [vmem:[#allocation2 + $0x520] sm:$0xff]
    %v194 = vld [vmem:[#allocation2 + $0x528] sm:$0xff]
    %v195 = vld [vmem:[#allocation2 + $0x530] sm:$0xff]
    %v196 = vld [vmem:[#allocation2 + $0x538] sm:$0xff]
    %v197 = vld [vmem:[#allocation2 + $0x540] sm:$0xff]
    %v198 = vld [vmem:[#allocation2 + $0x548] sm:$0xff]
    %v199 = vld [vmem:[#allocation2 + $0x550] sm:$0xff]
    %v200 = vld [vmem:[#allocation2 + $0x558] sm:$0xff]
    %v201 = vld [vmem:[#allocation2 + $0x560] sm:$0xff]
    %v202 = vld [vmem:[#allocation2 + $0x568] sm:$0xff]
    %v203 = vld [vmem:[#allocation2 + $0x570] sm:$0xff]
    %v204 = vld [vmem:[#allocation2 + $0x578] sm:$0xff]
    %v205 = vld [vmem:[#allocation2 + $0x580] sm:$0xff]
    %v206 = vld [vmem:[#allocation2 + $0x588] sm:$0xff]
    %v207 = vld [vmem:[#allocation2 + $0x590] sm:$0xff]
    %v208 = vld [vmem:[#allocation2 + $0x598] sm:$0xff]
    %v209 = vld [vmem:[#allocation2 + $0x5a0] sm:$0xff]
    %v210 = vld [vmem:[#allocation2 + $0x5a8] sm:$0xff]
    %v211 = vld [vmem:[#allocation2 + $0x5b0] sm:$0xff]
    %v212 = vld [vmem:[#allocation2 + $0x5b8] sm:$0xff]
    %v213 = vld [vmem:[#allocation2 + $0x5c0] sm:$0xff]
    %v214 = vld [vmem:[#allocation2 + $0x5c8] sm:$0xff]
    %v215 = vld [vmem:[#allocation2 + $0x5d0] sm:$0xff]
    %v216 = vld [vmem:[#allocation2 + $0x5d8] sm:$0xff]
    %v217 = vld [vmem:[#allocation2 + $0x5e0] sm:$0xff]
    %v218 = vld [vmem:[#allocation2 + $0x5e8] sm:$0xff]
    %v219 = vld [vmem:[#allocation2 + $0x5f0] sm:$0xff]
    %v220 = vld [vmem:[#allocation2 + $0x5f8] sm:$0xff]
    %v221 = vld [vmem:[#allocation2 + $0x600] sm:$0xff]
    %v222 = vld [vmem:[#allocation2 + $0x608] sm:$0xff]
    %v223 = vld [vmem:[#allocation2 + $0x610] sm:$0xff]
    %v224 = vld [vmem:[#allocation2 + $0x618] sm:$0xff]
    %v225 = vld [vmem:[#allocation2 + $0x620] sm:$0xff]
    %v226 = vld [vmem:[#allocation2 + $0x628] sm:$0xff]
    %v227 = vld [vmem:[#allocation2 + $0x630] sm:$0xff]
    %v228 = vld [vmem:[#allocation2 + $0x638] sm:$0xff]
    %v229 = vld [vmem:[#allocation2 + $0x640] sm:$0xff]
    %v230 = vld [vmem:[#allocation2 + $0x648] sm:$0xff]
    %v231 = vld [vmem:[#allocation2 + $0x650] sm:$0xff]
    %v232 = vld [vmem:[#allocation2 + $0x658] sm:$0xff]
    %v233 = vld [vmem:[#allocation2 + $0x660] sm:$0xff]
    %v234 = vld [vmem:[#allocation2 + $0x668] sm:$0xff]
    %v235 = vld [vmem:[#allocation2 + $0x670] sm:$0xff]
    %v236 = vld [vmem:[#allocation2 + $0x678] sm:$0xff]
    %v237 = vld [vmem:[#allocation2 + $0x680] sm:$0xff]
    %v238 = vld [vmem:[#allocation2 + $0x688] sm:$0xff]
    %v239 = vld [vmem:[#allocation2 + $0x690] sm:$0xff]
    %v240 = vld [vmem:[#allocation2 + $0x698] sm:$0xff]
    %v241 = vld [vmem:[#allocation2 + $0x6a0] sm:$0xff]
    %v242 = vld [vmem:[#allocation2 + $0x6a8] sm:$0xff]
    %v243 = vld [vmem:[#allocation2 + $0x6b0] sm:$0xff]
    %v244 = vld [vmem:[#allocation2 + $0x6b8] sm:$0xff]
    %v245 = vld [vmem:[#allocation2 + $0x6c0] sm:$0xff]
    %v246 = vld [vmem:[#allocation2 + $0x6c8] sm:$0xff]
    %v247 = vld [vmem:[#allocation2 + $0x6d0] sm:$0xff]
    %v248 = vld [vmem:[#allocation2 + $0x6d8] sm:$0xff]
    %v249 = vld [vmem:[#allocation2 + $0x6e0] sm:$0xff]
    %v250 = vld [vmem:[#allocation2 + $0x6e8] sm:$0xff]
    %v251 = vld [vmem:[#allocation2 + $0x6f0] sm:$0xff]
    %v252 = vld [vmem:[#allocation2 + $0x6f8] sm:$0xff]
    %v253 = vld [vmem:[#allocation2 + $0x700] sm:$0xff]
    %v254 = vld [vmem:[#allocation2 + $0x708] sm:$0xff]
    %v255 = vld [vmem:[#allocation2 + $0x710] sm:$0xff]
    %v256 = vld [vmem:[#allocation2 + $0x718] sm:$0xff]
    %v257 = vld [vmem:[#allocation2 + $0x720] sm:$0xff]
    %v258 = vld [vmem:[#allocation2 + $0x728] sm:$0xff]
    %v259 = vld [vmem:[#allocation2 + $0x730] sm:$0xff]
    %v260 = vld [vmem:[#allocation2 + $0x738] sm:$0xff]
    %v261 = vld [vmem:[#allocation2 + $0x740] sm:$0xff]
    %v262 = vld [vmem:[#allocation2 + $0x748] sm:$0xff]
    %v263 = vld [vmem:[#allocation2 + $0x750] sm:$0xff]
    %v264 = vld [vmem:[#allocation2 + $0x758] sm:$0xff]
    %v265 = vld [vmem:[#allocation2 + $0x760] sm:$0xff]
    %v266 = vld [vmem:[#allocation2 + $0x768] sm:$0xff]
    %v267 = vld [vmem:[#allocation2 + $0x770] sm:$0xff]
    %v268 = vld [vmem:[#allocation2 + $0x778] sm:$0xff]
    %v269 = vld [vmem:[#allocation2 + $0x780] sm:$0xff]
    %v270 = vld [vmem:[#allocation2 + $0x788] sm:$0xff]
    %v271 = vld [vmem:[#allocation2 + $0x790] sm:$0xff]
    %v272 = vld [vmem:[#allocation2 + $0x798] sm:$0xff]
    %v273 = vld [vmem:[#allocation2 + $0x7a0] sm:$0xff]
    %v274 = vld [vmem:[#allocation2 + $0x7a8] sm:$0xff]
    %v275 = vld [vmem:[#allocation2 + $0x7b0] sm:$0xff]
    %v276 = vld [vmem:[#allocation2 + $0x7b8] sm:$0xff]
    %v277 = vld [vmem:[#allocation2 + $0x7c0] sm:$0xff]
    %v278 = vld [vmem:[#allocation2 + $0x7c8] sm:$0xff]
    %v279 = vld [vmem:[#allocation2 + $0x7d0] sm:$0xff]
    %v280 = vld [vmem:[#allocation2 + $0x7d8] sm:$0xff]
    %v281 = vld [vmem:[#allocation2 + $0x7e0] sm:$0xff]
    %v282 = vld [vmem:[#allocation2 + $0x7e8] sm:$0xff]
    %v283 = vld [vmem:[#allocation2 + $0x7f0] sm:$0xff]
    %v284 = vld [vmem:[#allocation2 + $0x7f8] sm:$0xff]
    %v285 = vld [vmem:[#allocation2 + $0x800] sm:$0xff]
    %v286 = vld [vmem:[#allocation2 + $0x808] sm:$0xff]
    %v287 = vld [vmem:[#allocation2 + $0x810] sm:$0xff]
    %v288 = vld [vmem:[#allocation2 + $0x818] sm:$0xff]
    %v289 = vld [vmem:[#allocation2 + $0x820] sm:$0xff]
    %v290 = vld [vmem:[#allocation2 + $0x828] sm:$0xff]
    %v291 = vld [vmem:[#allocation2 + $0x830] sm:$0xff]
    %v292 = vld [vmem:[#allocation2 + $0x838] sm:$0xff]
    %v293 = vld [vmem:[#allocation2 + $0x840] sm:$0xff]
    %v294 = vld [vmem:[#allocation2 + $0x848] sm:$0xff]
    %v295 = vld [vmem:[#allocation2 + $0x850] sm:$0xff]
    %v296 = vld [vmem:[#allocation2 + $0x858] sm:$0xff]
    %v297 = vld [vmem:[#allocation2 + $0x860] sm:$0xff]
    %v298 = vld [vmem:[#allocation2 + $0x868] sm:$0xff]
    %v299 = vld [vmem:[#allocation2 + $0x870] sm:$0xff]
    %v300 = vld [vmem:[#allocation2 + $0x878] sm:$0xff]
    %v301 = vld [vmem:[#allocation2 + $0x880] sm:$0xff]
    %v302 = vld [vmem:[#allocation2 + $0x888] sm:$0xff]
    %v303 = vld [vmem:[#allocation2 + $0x890] sm:$0xff]
    %v304 = vld [vmem:[#allocation2 + $0x898] sm:$0xff]
    %v305 = vld [vmem:[#allocation2 + $0x8a0] sm:$0xff]
    %v306 = vld [vmem:[#allocation2 + $0x8a8] sm:$0xff]
    %v307 = vld [vmem:[#allocation2 + $0x8b0] sm:$0xff]
    %v308 = vld [vmem:[#allocation2 + $0x8b8] sm:$0xff]
    %v309 = vld [vmem:[#allocation2 + $0x8c0] sm:$0xff]
    %v310 = vld [vmem:[#allocation2 + $0x8c8] sm:$0xff]
    %v311 = vld [vmem:[#allocation2 + $0x8d0] sm:$0xff]
    %v312 = vld [vmem:[#allocation2 + $0x8d8] sm:$0xff]
    %v313 = vld [vmem:[#allocation2 + $0x8e0] sm:$0xff]
    %v314 = vld [vmem:[#allocation2 + $0x8e8] sm:$0xff]
    %v315 = vld [vmem:[#allocation2 + $0x8f0] sm:$0xff]
    %v316 = vld [vmem:[#allocation2 + $0x8f8] sm:$0xff]
    %v317 = vld [vmem:[#allocation2 + $0x900] sm:$0xff]
    %v318 = vld [vmem:[#allocation2 + $0x908] sm:$0xff]
    %v319 = vld [vmem:[#allocation2 + $0x910] sm:$0xff]
    %v320 = vld [vmem:[#allocation2 + $0x918] sm:$0xff]
    %v321 = vld [vmem:[#allocation2 + $0x920] sm:$0xff]
    %v322 = vld [vmem:[#allocation2 + $0x928] sm:$0xff]
    %v323 = vld [vmem:[#allocation2 + $0x930] sm:$0xff]
    %v324 = vld [vmem:[#allocation2 + $0x938] sm:$0xff]
    %v325 = vld [vmem:[#allocation2 + $0x940] sm:$0xff]
    %v326 = vld [vmem:[#allocation2 + $0x948] sm:$0xff]
    %v327 = vld [vmem:[#allocation2 + $0x950] sm:$0xff]
    %v328 = vld [vmem:[#allocation2 + $0x958] sm:$0xff]
    %v329 = vld [vmem:[#allocation2 + $0x960] sm:$0xff]
    %v330 = vld [vmem:[#allocation2 + $0x968] sm:$0xff]
    %v331 = vld [vmem:[#allocation2 + $0x970] sm:$0xff]
    %v332 = vld [vmem:[#allocation2 + $0x978] sm:$0xff]
    %v333 = vld [vmem:[#allocation2 + $0x980] sm:$0xff]
    %v334 = vld [vmem:[#allocation2 + $0x988] sm:$0xff]
    %v335 = vld [vmem:[#allocation2 + $0x990] sm:$0xff]
    %v336 = vld [vmem:[#allocation2 + $0x998] sm:$0xff]
    %v337 = vld [vmem:[#allocation2 + $0x9a0] sm:$0xff]
    %v338 = vld [vmem:[#allocation2 + $0x9a8] sm:$0xff]
    %v339 = vld [vmem:[#allocation2 + $0x9b0] sm:$0xff]
    %v340 = vld [vmem:[#allocation2 + $0x9b8] sm:$0xff]
    %v341 = vld [vmem:[#allocation2 + $0x9c0] sm:$0xff]
    %v342 = vld [vmem:[#allocation2 + $0x9c8] sm:$0xff]
    %v343 = vld [vmem:[#allocation2 + $0x9d0] sm:$0xff]
    %v344 = vld [vmem:[#allocation2 + $0x9d8] sm:$0xff]
    %v345 = vld [vmem:[#allocation2 + $0x9e0] sm:$0xff]
    %v346 = vld [vmem:[#allocation2 + $0x9e8] sm:$0xff]
    %v347 = vld [vmem:[#allocation2 + $0x9f0] sm:$0xff]
    %v348 = vld [vmem:[#allocation2 + $0x9f8] sm:$0xff]
    %v349 = vld [vmem:[#allocation2 + $0xa00] sm:$0xff]
    %v350 = vld [vmem:[#allocation2 + $0xa08] sm:$0xff]
    %v351 = vld [vmem:[#allocation2 + $0xa10] sm:$0xff]
    %v352 = vld [vmem:[#allocation2 + $0xa18] sm:$0xff]
    %v353 = vld [vmem:[#allocation2 + $0xa20] sm:$0xff]
    %v354 = vld [vmem:[#allocation2 + $0xa28] sm:$0xff]
    %v355 = vld [vmem:[#allocation2 + $0xa30] sm:$0xff]
    %v356 = vld [vmem:[#allocation2 + $0xa38] sm:$0xff]
    %v357 = vld [vmem:[#allocation2 + $0xa40] sm:$0xff]
    %v358 = vld [vmem:[#allocation2 + $0xa48] sm:$0xff]
    %v359 = vld [vmem:[#allocation2 + $0xa50] sm:$0xff]
    %v360 = vld [vmem:[#allocation2 + $0xa58] sm:$0xff]
    %v361 = vld [vmem:[#allocation2 + $0xa60] sm:$0xff]
    %v362 = vld [vmem:[#allocation2 + $0xa68] sm:$0xff]
    %v363 = vld [vmem:[#allocation2 + $0xa70] sm:$0xff]
    %v364 = vld [vmem:[#allocation2 + $0xa78] sm:$0xff]
    %v365 = vld [vmem:[#allocation2 + $0xa80] sm:$0xff]
    %v366 = vld [vmem:[#allocation2 + $0xa88] sm:$0xff]
    %v367 = vld [vmem:[#allocation2 + $0xa90] sm:$0xff]
    %v368 = vld [vmem:[#allocation2 + $0xa98] sm:$0xff]
    %v369 = vld [vmem:[#allocation2 + $0xaa0] sm:$0xff]
    %v370 = vld [vmem:[#allocation2 + $0xaa8] sm:$0xff]
    %v371 = vld [vmem:[#allocation2 + $0xab0] sm:$0xff]
    %v372 = vld [vmem:[#allocation2 + $0xab8] sm:$0xff]
    %v373 = vld [vmem:[#allocation2 + $0xac0] sm:$0xff]
    %v374 = vld [vmem:[#allocation2 + $0xac8] sm:$0xff]
    %v375 = vld [vmem:[#allocation2 + $0xad0] sm:$0xff]
    %v376 = vld [vmem:[#allocation2 + $0xad8] sm:$0xff]
    %v377 = vld [vmem:[#allocation2 + $0xae0] sm:$0xff]
    %v378 = vld [vmem:[#allocation2 + $0xae8] sm:$0xff]
    %v379 = vld [vmem:[#allocation2 + $0xaf0] sm:$0xff]
    %v380 = vld [vmem:[#allocation2 + $0xaf8] sm:$0xff]
    %v381 = vld [vmem:[#allocation2 + $0xb00] sm:$0xff]
    %v382 = vld [vmem:[#allocation2 + $0xb08] sm:$0xff]
    %v383 = vld [vmem:[#allocation2 + $0xb10] sm:$0xff]
    %v384 = vld [vmem:[#allocation2 + $0xb18] sm:$0xff]
    %v385 = vld [vmem:[#allocation2 + $0xb20] sm:$0xff]
    %v386 = vld [vmem:[#allocation2 + $0xb28] sm:$0xff]
    %v387 = vld [vmem:[#allocation2 + $0xb30] sm:$0xff]
    %v388 = vld [vmem:[#allocation2 + $0xb38] sm:$0xff]
    %v389 = vld [vmem:[#allocation2 + $0xb40] sm:$0xff]
    %v390 = vld [vmem:[#allocation2 + $0xb48] sm:$0xff]
    %v391 = vld [vmem:[#allocation2 + $0xb50] sm:$0xff]
    %v392 = vld [vmem:[#allocation2 + $0xb58] sm:$0xff]
    %v393 = vld [vmem:[#allocation2 + $0xb60] sm:$0xff]
    %v394 = vld [vmem:[#allocation2 + $0xb68] sm:$0xff]
    %v395 = vld [vmem:[#allocation2 + $0xb70] sm:$0xff]
    %v396 = vld [vmem:[#allocation2 + $0xb78] sm:$0xff]
    %v397 = vld [vmem:[#allocation2 + $0xb80] sm:$0xff]
    %v398 = vld [vmem:[#allocation2 + $0xb88] sm:$0xff]
    %v399 = vld [vmem:[#allocation2 + $0xb90] sm:$0xff]
    %v400 = vld [vmem:[#allocation2 + $0xb98] sm:$0xff]
    %v401 = vld [vmem:[#allocation2 + $0xba0] sm:$0xff]
    %v402 = vld [vmem:[#allocation2 + $0xba8] sm:$0xff]
    %v403 = vld [vmem:[#allocation2 + $0xbb0] sm:$0xff]
    %v404 = vld [vmem:[#allocation2 + $0xbb8] sm:$0xff]
    %v405 = vld [vmem:[#allocation2 + $0xbc0] sm:$0xff]
    %v406 = vld [vmem:[#allocation2 + $0xbc8] sm:$0xff]
    %v407 = vld [vmem:[#allocation2 + $0xbd0] sm:$0xff]
    %v408 = vld [vmem:[#allocation2 + $0xbd8] sm:$0xff]
    %v409 = vld [vmem:[#allocation2 + $0xbe0] sm:$0xff]
    %v410 = vld [vmem:[#allocation2 + $0xbe8] sm:$0xff]
    %v411 = vld [vmem:[#allocation2 + $0xbf0] sm:$0xff]
    %v412 = vld [vmem:[#allocation2 + $0xbf8] sm:$0xff]
    %v413 = vld [vmem:[#allocation2 + $0xc00] sm:$0xff]
    %v414 = vld [vmem:[#allocation2 + $0xc08] sm:$0xff]
    %v415 = vld [vmem:[#allocation2 + $0xc10] sm:$0xff]
    %v416 = vld [vmem:[#allocation2 + $0xc18] sm:$0xff]
    %v417 = vld [vmem:[#allocation2 + $0xc20] sm:$0xff]
    %v418 = vld [vmem:[#allocation2 + $0xc28] sm:$0xff]
    %v419 = vld [vmem:[#allocation2 + $0xc30] sm:$0xff]
    %v420 = vld [vmem:[#allocation2 + $0xc38] sm:$0xff]
    %v421 = vld [vmem:[#allocation2 + $0xc40] sm:$0xff]
    %v422 = vld [vmem:[#allocation2 + $0xc48] sm:$0xff]
    %v423 = vld [vmem:[#allocation2 + $0xc50] sm:$0xff]
    %v424 = vld [vmem:[#allocation2 + $0xc58] sm:$0xff]
    %v425 = vld [vmem:[#allocation2 + $0xc60] sm:$0xff]
    %v426 = vld [vmem:[#allocation2 + $0xc68] sm:$0xff]
    %v427 = vld [vmem:[#allocation2 + $0xc70] sm:$0xff]
    %v428 = vld [vmem:[#allocation2 + $0xc78] sm:$0xff]
    %v429 = vld [vmem:[#allocation2 + $0xc80] sm:$0xff]
    %v430 = vld [vmem:[#allocation2 + $0xc88] sm:$0xff]
    %v431 = vld [vmem:[#allocation2 + $0xc90] sm:$0xff]
    %v432 = vld [vmem:[#allocation2 + $0xc98] sm:$0xff]
    %v433 = vld [vmem:[#allocation2 + $0xca0] sm:$0xff]
    %v434 = vld [vmem:[#allocation2 + $0xca8] sm:$0xff]
    %v435 = vld [vmem:[#allocation2 + $0xcb0] sm:$0xff]
    %v436 = vld [vmem:[#allocation2 + $0xcb8] sm:$0xff]
    %v437 = vld [vmem:[#allocation2 + $0xcc0] sm:$0xff]
    %v438 = vld [vmem:[#allocation2 + $0xcc8] sm:$0xff]
    %v439 = vld [vmem:[#allocation2 + $0xcd0] sm:$0xff]
    %v440 = vld [vmem:[#allocation2 + $0xcd8] sm:$0xff]
    %v441 = vld [vmem:[#allocation2 + $0xce0] sm:$0xff]
    %v442 = vld [vmem:[#allocation2 + $0xce8] sm:$0xff]
    %v443 = vld [vmem:[#allocation2 + $0xcf0] sm:$0xff]
    %v444 = vld [vmem:[#allocation2 + $0xcf8] sm:$0xff]
    %v445 = vld [vmem:[#allocation2 + $0xd00] sm:$0xff]
    %v446 = vld [vmem:[#allocation2 + $0xd08] sm:$0xff]
    %v447 = vld [vmem:[#allocation2 + $0xd10] sm:$0xff]
    %v448 = vld [vmem:[#allocation2 + $0xd18] sm:$0xff]
    %v449 = vld [vmem:[#allocation2 + $0xd20] sm:$0xff]
    %v450 = vld [vmem:[#allocation2 + $0xd28] sm:$0xff]
    %v451 = vld [vmem:[#allocation2 + $0xd30] sm:$0xff]
    %v452 = vld [vmem:[#allocation2 + $0xd38] sm:$0xff]
    %v453 = vld [vmem:[#allocation2 + $0xd40] sm:$0xff]
    %v454 = vld [vmem:[#allocation2 + $0xd48] sm:$0xff]
    %v455 = vld [vmem:[#allocation2 + $0xd50] sm:$0xff]
    %v456 = vld [vmem:[#allocation2 + $0xd58] sm:$0xff]
    %v457 = vld [vmem:[#allocation2 + $0xd60] sm:$0xff]
    %v458 = vld [vmem:[#allocation2 + $0xd68] sm:$0xff]
    %v459 = vld [vmem:[#allocation2 + $0xd70] sm:$0xff]
    %v460 = vld [vmem:[#allocation2 + $0xd78] sm:$0xff]
    %v461 = vld [vmem:[#allocation2 + $0xd80] sm:$0xff]
    %v462 = vld [vmem:[#allocation2 + $0xd88] sm:$0xff]
    %v463 = vld [vmem:[#allocation2 + $0xd90] sm:$0xff]
    %v464 = vld [vmem:[#allocation2 + $0xd98] sm:$0xff]
    %v465 = vld [vmem:[#allocation2 + $0xda0] sm:$0xff]
    %v466 = vld [vmem:[#allocation2 + $0xda8] sm:$0xff]
    %v467 = vld [vmem:[#allocation2 + $0xdb0] sm:$0xff]
    %v468 = vld [vmem:[#allocation2 + $0xdb8] sm:$0xff]
    %v469 = vld [vmem:[#allocation2 + $0xdc0] sm:$0xff]
    %v470 = vld [vmem:[#allocation2 + $0xdc8] sm:$0xff]
    %v471 = vld [vmem:[#allocation2 + $0xdd0] sm:$0xff]
    %v472 = vld [vmem:[#allocation2 + $0xdd8] sm:$0xff]
    %v473 = vld [vmem:[#allocation2 + $0xde0] sm:$0xff]
    %v474 = vld [vmem:[#allocation2 + $0xde8] sm:$0xff]
    %v475 = vld [vmem:[#allocation2 + $0xdf0] sm:$0xff]
    %v476 = vld [vmem:[#allocation2 + $0xdf8] sm:$0xff]
    %v477 = vld [vmem:[#allocation2 + $0xe00] sm:$0xff]
    %v478 = vld [vmem:[#allocation2 + $0xe08] sm:$0xff]
    %v479 = vld [vmem:[#allocation2 + $0xe10] sm:$0xff]
    %v480 = vld [vmem:[#allocation2 + $0xe18] sm:$0xff]
    %v481 = vld [vmem:[#allocation2 + $0xe20] sm:$0xff]
    %v482 = vld [vmem:[#allocation2 + $0xe28] sm:$0xff]
    %v483 = vld [vmem:[#allocation2 + $0xe30] sm:$0xff]
    %v484 = vld [vmem:[#allocation2 + $0xe38] sm:$0xff]
    %v485 = vld [vmem:[#allocation2 + $0xe40] sm:$0xff]
    %v486 = vld [vmem:[#allocation2 + $0xe48] sm:$0xff]
    %v487 = vld [vmem:[#allocation2 + $0xe50] sm:$0xff]
    %v488 = vld [vmem:[#allocation2 + $0xe58] sm:$0xff]
    %v489 = vld [vmem:[#allocation2 + $0xe60] sm:$0xff]
    %v490 = vld [vmem:[#allocation2 + $0xe68] sm:$0xff]
    %v491 = vld [vmem:[#allocation2 + $0xe70] sm:$0xff]
    %v492 = vld [vmem:[#allocation2 + $0xe78] sm:$0xff]
    %v493 = vld [vmem:[#allocation2 + $0xe80] sm:$0xff]
    %v494 = vld [vmem:[#allocation2 + $0xe88] sm:$0xff]
    %v495 = vld [vmem:[#allocation2 + $0xe90] sm:$0xff]
    %v496 = vld [vmem:[#allocation2 + $0xe98] sm:$0xff]
    %v497 = vld [vmem:[#allocation2 + $0xea0] sm:$0xff]
    %v498 = vld [vmem:[#allocation2 + $0xea8] sm:$0xff]
    %v499 = vld [vmem:[#allocation2 + $0xeb0] sm:$0xff]
    %v500 = vld [vmem:[#allocation2 + $0xeb8] sm:$0xff]
    %v501 = vld [vmem:[#allocation2 + $0xec0] sm:$0xff]
    %v502 = vld [vmem:[#allocation2 + $0xec8] sm:$0xff]
    %v503 = vld [vmem:[#allocation2 + $0xed0] sm:$0xff]
    %v504 = vld [vmem:[#allocation2 + $0xed8] sm:$0xff]
    %v505 = vld [vmem:[#allocation2 + $0xee0] sm:$0xff]
    %v506 = vld [vmem:[#allocation2 + $0xee8] sm:$0xff]
    %v507 = vld [vmem:[#allocation2 + $0xef0] sm:$0xff]
    %v508 = vld [vmem:[#allocation2 + $0xef8] sm:$0xff]
    %v509 = vld [vmem:[#allocation2 + $0xf00] sm:$0xff]
    %v510 = vld [vmem:[#allocation2 + $0xf08] sm:$0xff]
    %v511 = vld [vmem:[#allocation2 + $0xf10] sm:$0xff]
    %v512 = vld [vmem:[#allocation2 + $0xf18] sm:$0xff]
    %v513 = vld [vmem:[#allocation2 + $0xf20] sm:$0xff]
    %v514 = vld [vmem:[#allocation2 + $0xf28] sm:$0xff]
    %v515 = vld [vmem:[#allocation2 + $0xf30] sm:$0xff]
    %v516 = vld [vmem:[#allocation2 + $0xf38] sm:$0xff]
    %v517 = vld [vmem:[#allocation2 + $0xf40] sm:$0xff]
    %v518 = vld [vmem:[#allocation2 + $0xf48] sm:$0xff]
    %v519 = vld [vmem:[#allocation2 + $0xf50] sm:$0xff]
    %v520 = vld [vmem:[#allocation2 + $0xf58] sm:$0xff]
    %v521 = vld [vmem:[#allocation2 + $0xf60] sm:$0xff]
    %v522 = vld [vmem:[#allocation2 + $0xf68] sm:$0xff]
    %v523 = vld [vmem:[#allocation2 + $0xf70] sm:$0xff]
    %v524 = vld [vmem:[#allocation2 + $0xf78] sm:$0xff]
    %v525 = vld [vmem:[#allocation2 + $0xf80] sm:$0xff]
    %v526 = vld [vmem:[#allocation2 + $0xf88] sm:$0xff]
    %v527 = vld [vmem:[#allocation2 + $0xf90] sm:$0xff]
    %v528 = vld [vmem:[#allocation2 + $0xf98] sm:$0xff]
    %v529 = vld [vmem:[#allocation2 + $0xfa0] sm:$0xff]
    %v530 = vld [vmem:[#allocation2 + $0xfa8] sm:$0xff]
    %v531 = vld [vmem:[#allocation2 + $0xfb0] sm:$0xff]
    %v532 = vld [vmem:[#allocation2 + $0xfb8] sm:$0xff]
    %v533 = vld [vmem:[#allocation2 + $0xfc0] sm:$0xff]
    %v534 = vld [vmem:[#allocation2 + $0xfc8] sm:$0xff]
    %v535 = vld [vmem:[#allocation2 + $0xfd0] sm:$0xff]
    %v536 = vld [vmem:[#allocation2 + $0xfd8] sm:$0xff]
    %v537 = vld [vmem:[#allocation2 + $0xfe0] sm:$0xff]
    %v538 = vld [vmem:[#allocation2 + $0xfe8] sm:$0xff]
    %v539 = vld [vmem:[#allocation2 + $0xff0] sm:$0xff]
    %v540 = vld [vmem:[#allocation2 + $0xff8] sm:$0xff]
    %v541 = vld [vmem:[#allocation2 + $0x1000] sm:$0xff]
    %v542 = vld [vmem:[#allocation2 + $0x1008] sm:$0xff]
    %v543 = vld [vmem:[#allocation2 + $0x1010] sm:$0xff]
    %v544 = vld [vmem:[#allocation2 + $0x1018] sm:$0xff]
    %v545 = vld [vmem:[#allocation2 + $0x1020] sm:$0xff]
    %v546 = vld [vmem:[#allocation2 + $0x1028] sm:$0xff]
    %v547 = vld [vmem:[#allocation2 + $0x1030] sm:$0xff]
    %v548 = vld [vmem:[#allocation2 + $0x1038] sm:$0xff]
    %v549 = vld [vmem:[#allocation2 + $0x1040] sm:$0xff]
    %v550 = vld [vmem:[#allocation2 + $0x1048] sm:$0xff]
    %v551 = vld [vmem:[#allocation2 + $0x1050] sm:$0xff]
    %v552 = vld [vmem:[#allocation2 + $0x1058] sm:$0xff]
    %v553 = vld [vmem:[#allocation2 + $0x1060] sm:$0xff]
    %v554 = vld [vmem:[#allocation2 + $0x1068] sm:$0xff]
    %v555 = vld [vmem:[#allocation2 + $0x1070] sm:$0xff]
    %v556 = vld [vmem:[#allocation2 + $0x1078] sm:$0xff]
    %v557 = vld [vmem:[#allocation2 + $0x1080] sm:$0xff]
    %v558 = vld [vmem:[#allocation2 + $0x1088] sm:$0xff]
    %v559 = vld [vmem:[#allocation2 + $0x1090] sm:$0xff]
    %v560 = vld [vmem:[#allocation2 + $0x1098] sm:$0xff]
    %v561 = vld [vmem:[#allocation2 + $0x10a0] sm:$0xff]
    %v562 = vld [vmem:[#allocation2 + $0x10a8] sm:$0xff]
    %v563 = vld [vmem:[#allocation2 + $0x10b0] sm:$0xff]
    %v564 = vld [vmem:[#allocation2 + $0x10b8] sm:$0xff]
    %v565 = vld [vmem:[#allocation2 + $0x10c0] sm:$0xff]
    %v566 = vld [vmem:[#allocation2 + $0x10c8] sm:$0xff]
    %v567 = vld [vmem:[#allocation2 + $0x10d0] sm:$0xff]
    %v568 = vld [vmem:[#allocation2 + $0x10d8] sm:$0xff]
    %v569 = vld [vmem:[#allocation2 + $0x10e0] sm:$0xff]
    %v570 = vld [vmem:[#allocation2 + $0x10e8] sm:$0xff]
    %v571 = vld [vmem:[#allocation2 + $0x10f0] sm:$0xff]
    %v572 = vld [vmem:[#allocation2 + $0x10f8] sm:$0xff]
    %v573 = vld [vmem:[#allocation2 + $0x1100] sm:$0xff]
    %v574 = vld [vmem:[#allocation2 + $0x1108] sm:$0xff]
    %v575 = vld [vmem:[#allocation2 + $0x1110] sm:$0xff]
    %v576 = vld [vmem:[#allocation2 + $0x1118] sm:$0xff]
    %v577 = vld [vmem:[#allocation2 + $0x1120] sm:$0xff]
    %v578 = vld [vmem:[#allocation2 + $0x1128] sm:$0xff]
    %v579 = vld [vmem:[#allocation2 + $0x1130] sm:$0xff]
    %v580 = vld [vmem:[#allocation2 + $0x1138] sm:$0xff]
    %v581 = vld [vmem:[#allocation2 + $0x1140] sm:$0xff]
    %v582 = vld [vmem:[#allocation2 + $0x1148] sm:$0xff]
    %v583 = vld [vmem:[#allocation2 + $0x1150] sm:$0xff]
    %v584 = vld [vmem:[#allocation2 + $0x1158] sm:$0xff]
    %v585 = vld [vmem:[#allocation2 + $0x1160] sm:$0xff]
    %v586 = vld [vmem:[#allocation2 + $0x1168] sm:$0xff]
    %v587 = vld [vmem:[#allocation2 + $0x1170] sm:$0xff]
    %v588 = vld [vmem:[#allocation2 + $0x1178] sm:$0xff]
    %v589 = vld [vmem:[#allocation2 + $0x1180] sm:$0xff]
    %v590 = vld [vmem:[#allocation2 + $0x1188] sm:$0xff]
    %v591 = vld [vmem:[#allocation2 + $0x1190] sm:$0xff]
    %v592 = vld [vmem:[#allocation2 + $0x1198] sm:$0xff]
    %v593 = vld [vmem:[#allocation2 + $0x11a0] sm:$0xff]
    %v594 = vld [vmem:[#allocation2 + $0x11a8] sm:$0xff]
    %v595 = vld [vmem:[#allocation2 + $0x11b0] sm:$0xff]
    %v596 = vld [vmem:[#allocation2 + $0x11b8] sm:$0xff]
    %v597 = vld [vmem:[#allocation2 + $0x11c0] sm:$0xff]
    %v598 = vld [vmem:[#allocation2 + $0x11c8] sm:$0xff]
    %v599 = vld [vmem:[#allocation2 + $0x11d0] sm:$0xff]
    %v600 = vld [vmem:[#allocation2 + $0x11d8] sm:$0xff]
    %v601 = vld [vmem:[#allocation2 + $0x11e0] sm:$0xff]
    %v602 = vld [vmem:[#allocation2 + $0x11e8] sm:$0xff]
    %v603 = vld [vmem:[#allocation2 + $0x11f0] sm:$0xff]
    %v604 = vld [vmem:[#allocation2 + $0x11f8] sm:$0xff]
    %v605 = vld [vmem:[#allocation2 + $0x1200] sm:$0xff]
    %v606 = vld [vmem:[#allocation2 + $0x1208] sm:$0xff]
    %v607 = vld [vmem:[#allocation2 + $0x1210] sm:$0xff]
    %v608 = vld [vmem:[#allocation2 + $0x1218] sm:$0xff]
    %v609 = vld [vmem:[#allocation2 + $0x1220] sm:$0xff]
    %v610 = vld [vmem:[#allocation2 + $0x1228] sm:$0xff]
    %v611 = vld [vmem:[#allocation2 + $0x1230] sm:$0xff]
    %v612 = vld [vmem:[#allocation2 + $0x1238] sm:$0xff]
    %v613 = vld [vmem:[#allocation2 + $0x1240] sm:$0xff]
    %v614 = vld [vmem:[#allocation2 + $0x1248] sm:$0xff]
    %v615 = vld [vmem:[#allocation2 + $0x1250] sm:$0xff]
    %v616 = vld [vmem:[#allocation2 + $0x1258] sm:$0xff]
    %v617 = vld [vmem:[#allocation2 + $0x1260] sm:$0xff]
    %v618 = vld [vmem:[#allocation2 + $0x1268] sm:$0xff]
    %v619 = vld [vmem:[#allocation2 + $0x1270] sm:$0xff]
    %v620 = vld [vmem:[#allocation2 + $0x1278] sm:$0xff]
    %v621 = vld [vmem:[#allocation2 + $0x1280] sm:$0xff]
    %v622 = vld [vmem:[#allocation2 + $0x1288] sm:$0xff]
    %v623 = vld [vmem:[#allocation2 + $0x1290] sm:$0xff]
    %v624 = vld [vmem:[#allocation2 + $0x1298] sm:$0xff]
    %v625 = vld [vmem:[#allocation2 + $0x12a0] sm:$0xff]
    %v626 = vld [vmem:[#allocation2 + $0x12a8] sm:$0xff]
    %v627 = vld [vmem:[#allocation2 + $0x12b0] sm:$0xff]
    %v628 = vld [vmem:[#allocation2 + $0x12b8] sm:$0xff]
    %v629 = vld [vmem:[#allocation2 + $0x12c0] sm:$0xff]
    %v630 = vld [vmem:[#allocation2 + $0x12c8] sm:$0xff]
    %v631 = vld [vmem:[#allocation2 + $0x12d0] sm:$0xff]
    %v632 = vld [vmem:[#allocation2 + $0x12d8] sm:$0xff]
    %v633 = vld [vmem:[#allocation2 + $0x12e0] sm:$0xff]
    %v634 = vld [vmem:[#allocation2 + $0x12e8] sm:$0xff]
    %v635 = vld [vmem:[#allocation2 + $0x12f0] sm:$0xff]
    %v636 = vld [vmem:[#allocation2 + $0x12f8] sm:$0xff]
    %v637 = vld [vmem:[#allocation2 + $0x1300] sm:$0xff]
    %v638 = vld [vmem:[#allocation2 + $0x1308] sm:$0xff]
    %v639 = vld [vmem:[#allocation2 + $0x1310] sm:$0xff]
    %v640 = vld [vmem:[#allocation2 + $0x1318] sm:$0xff]
    %v641 = vld [vmem:[#allocation2 + $0x1320] sm:$0xff]
    %v642 = vld [vmem:[#allocation2 + $0x1328] sm:$0xff]
    %v643 = vld [vmem:[#allocation2 + $0x1330] sm:$0xff]
    %v644 = vld [vmem:[#allocation2 + $0x1338] sm:$0xff]
    %v645 = vld [vmem:[#allocation2 + $0x1340] sm:$0xff]
    %v646 = vld [vmem:[#allocation2 + $0x1348] sm:$0xff]
    %v647 = vld [vmem:[#allocation2 + $0x1350] sm:$0xff]
    %v648 = vld [vmem:[#allocation2 + $0x1358] sm:$0xff]
    %v649 = vld [vmem:[#allocation2 + $0x1360] sm:$0xff]
    %v650 = vld [vmem:[#allocation2 + $0x1368] sm:$0xff]
    %v651 = vld [vmem:[#allocation2 + $0x1370] sm:$0xff]
    %v652 = vld [vmem:[#allocation2 + $0x1378] sm:$0xff]
    %v653 = vld [vmem:[#allocation2 + $0x1380] sm:$0xff]
    %v654 = vld [vmem:[#allocation2 + $0x1388] sm:$0xff]
    %v655 = vld [vmem:[#allocation2 + $0x1390] sm:$0xff]
    %v656 = vld [vmem:[#allocation2 + $0x1398] sm:$0xff]
    %v657 = vld [vmem:[#allocation2 + $0x13a0] sm:$0xff]
    %v658 = vld [vmem:[#allocation2 + $0x13a8] sm:$0xff]
    %v659 = vld [vmem:[#allocation2 + $0x13b0] sm:$0xff]
    %v660 = vld [vmem:[#allocation2 + $0x13b8] sm:$0xff]
    %v661 = vld [vmem:[#allocation2 + $0x13c0] sm:$0xff]
    %v662 = vld [vmem:[#allocation2 + $0x13c8] sm:$0xff]
    %v663 = vld [vmem:[#allocation2 + $0x13d0] sm:$0xff]
    %v664 = vld [vmem:[#allocation2 + $0x13d8] sm:$0xff]
    %v665 = vld [vmem:[#allocation2 + $0x13e0] sm:$0xff]
    %v666 = vld [vmem:[#allocation2 + $0x13e8] sm:$0xff]
    %v667 = vld [vmem:[#allocation2 + $0x13f0] sm:$0xff]
    %v668 = vld [vmem:[#allocation2 + $0x13f8] sm:$0xff]
    %v669 = vld [vmem:[#allocation2 + $0x1400] sm:$0xff]
    %v670 = vld [vmem:[#allocation2 + $0x1408] sm:$0xff]
    %v671 = vld [vmem:[#allocation2 + $0x1410] sm:$0xff]
    %v672 = vld [vmem:[#allocation2 + $0x1418] sm:$0xff]
    %v673 = vld [vmem:[#allocation2 + $0x1420] sm:$0xff]
    %v674 = vld [vmem:[#allocation2 + $0x1428] sm:$0xff]
    %v675 = vld [vmem:[#allocation2 + $0x1430] sm:$0xff]
    %v676 = vld [vmem:[#allocation2 + $0x1438] sm:$0xff]
    %v677 = vld [vmem:[#allocation2 + $0x1440] sm:$0xff]
    %v678 = vld [vmem:[#allocation2 + $0x1448] sm:$0xff]
    %v679 = vld [vmem:[#allocation2 + $0x1450] sm:$0xff]
    %v680 = vld [vmem:[#allocation2 + $0x1458] sm:$0xff]
    %v681 = vld [vmem:[#allocation2 + $0x1460] sm:$0xff]
    %v682 = vld [vmem:[#allocation2 + $0x1468] sm:$0xff]
    %v683 = vld [vmem:[#allocation2 + $0x1470] sm:$0xff]
    %v684 = vld [vmem:[#allocation2 + $0x1478] sm:$0xff]
    %v685 = vld [vmem:[#allocation2 + $0x1480] sm:$0xff]
    %v686 = vld [vmem:[#allocation2 + $0x1488] sm:$0xff]
    %v687 = vld [vmem:[#allocation2 + $0x1490] sm:$0xff]
    %v688 = vld [vmem:[#allocation2 + $0x1498] sm:$0xff]
    %v689 = vld [vmem:[#allocation2 + $0x14a0] sm:$0xff]
    %v690 = vld [vmem:[#allocation2 + $0x14a8] sm:$0xff]
    %v691 = vld [vmem:[#allocation2 + $0x14b0] sm:$0xff]
    %v692 = vld [vmem:[#allocation2 + $0x14b8] sm:$0xff]
    %v693 = vld [vmem:[#allocation2 + $0x14c0] sm:$0xff]
    %v694 = vld [vmem:[#allocation2 + $0x14c8] sm:$0xff]
    %v695 = vld [vmem:[#allocation2 + $0x14d0] sm:$0xff]
    %v696 = vld [vmem:[#allocation2 + $0x14d8] sm:$0xff]
    %v697 = vld [vmem:[#allocation2 + $0x14e0] sm:$0xff]
    %v698 = vld [vmem:[#allocation2 + $0x14e8] sm:$0xff]
    %v699 = vld [vmem:[#allocation2 + $0x14f0] sm:$0xff]
    %v700 = vld [vmem:[#allocation2 + $0x14f8] sm:$0xff]
    %v701 = vld [vmem:[#allocation2 + $0x1500] sm:$0xff]
    %v702 = vld [vmem:[#allocation2 + $0x1508] sm:$0xff]
    %v703 = vld [vmem:[#allocation2 + $0x1510] sm:$0xff]
    %v704 = vld [vmem:[#allocation2 + $0x1518] sm:$0xff]
    %v705 = vld [vmem:[#allocation2 + $0x1520] sm:$0xff]
    %v706 = vld [vmem:[#allocation2 + $0x1528] sm:$0xff]
    %v707 = vld [vmem:[#allocation2 + $0x1530] sm:$0xff]
    %v708 = vld [vmem:[#allocation2 + $0x1538] sm:$0xff]
    %v709 = vld [vmem:[#allocation2 + $0x1540] sm:$0xff]
    %v710 = vld [vmem:[#allocation2 + $0x1548] sm:$0xff]
    %v711 = vld [vmem:[#allocation2 + $0x1550] sm:$0xff]
    %v712 = vld [vmem:[#allocation2 + $0x1558] sm:$0xff]
    %v713 = vld [vmem:[#allocation2 + $0x1560] sm:$0xff]
    %v714 = vld [vmem:[#allocation2 + $0x1568] sm:$0xff]
    %v715 = vld [vmem:[#allocation2 + $0x1570] sm:$0xff]
    %v716 = vld [vmem:[#allocation2 + $0x1578] sm:$0xff]
    %v717 = vld [vmem:[#allocation2 + $0x1580] sm:$0xff]
    %v718 = vld [vmem:[#allocation2 + $0x1588] sm:$0xff]
    %v719 = vld [vmem:[#allocation2 + $0x1590] sm:$0xff]
    %v720 = vld [vmem:[#allocation2 + $0x1598] sm:$0xff]
    %v721 = vld [vmem:[#allocation2 + $0x15a0] sm:$0xff]
    %v722 = vld [vmem:[#allocation2 + $0x15a8] sm:$0xff]
    %v723 = vld [vmem:[#allocation2 + $0x15b0] sm:$0xff]
    %v724 = vld [vmem:[#allocation2 + $0x15b8] sm:$0xff]
    %v725 = vld [vmem:[#allocation2 + $0x15c0] sm:$0xff]
    %v726 = vld [vmem:[#allocation2 + $0x15c8] sm:$0xff]
    %v727 = vld [vmem:[#allocation2 + $0x15d0] sm:$0xff]
    %v728 = vld [vmem:[#allocation2 + $0x15d8] sm:$0xff]
    %v729 = vld [vmem:[#allocation2 + $0x15e0] sm:$0xff]
    %v730 = vld [vmem:[#allocation2 + $0x15e8] sm:$0xff]
    %v731 = vld [vmem:[#allocation2 + $0x15f0] sm:$0xff]
    %v732 = vld [vmem:[#allocation2 + $0x15f8] sm:$0xff]
    %v733 = vld [vmem:[#allocation2 + $0x1600] sm:$0xff]
    %v734 = vld [vmem:[#allocation2 + $0x1608] sm:$0xff]
    %v735 = vld [vmem:[#allocation2 + $0x1610] sm:$0xff]
    %v736 = vld [vmem:[#allocation2 + $0x1618] sm:$0xff]
    %v737 = vld [vmem:[#allocation2 + $0x1620] sm:$0xff]
    %v738 = vld [vmem:[#allocation2 + $0x1628] sm:$0xff]
    %v739 = vld [vmem:[#allocation2 + $0x1630] sm:$0xff]
    %v740 = vld [vmem:[#allocation2 + $0x1638] sm:$0xff]
    %v741 = vld [vmem:[#allocation2 + $0x1640] sm:$0xff]
    %v742 = vld [vmem:[#allocation2 + $0x1648] sm:$0xff]
    %v743 = vld [vmem:[#allocation2 + $0x1650] sm:$0xff]
    %v744 = vld [vmem:[#allocation2 + $0x1658] sm:$0xff]
    %v745 = vld [vmem:[#allocation2 + $0x1660] sm:$0xff]
    %v746 = vld [vmem:[#allocation2 + $0x1668] sm:$0xff]
    %v747 = vld [vmem:[#allocation2 + $0x1670] sm:$0xff]
    %v748 = vld [vmem:[#allocation2 + $0x1678] sm:$0xff]
    %v749 = vld [vmem:[#allocation2 + $0x1680] sm:$0xff]
    %v750 = vld [vmem:[#allocation2 + $0x1688] sm:$0xff]
    %v751 = vld [vmem:[#allocation2 + $0x1690] sm:$0xff]
    %v752 = vld [vmem:[#allocation2 + $0x1698] sm:$0xff]
    %v753 = vld [vmem:[#allocation2 + $0x16a0] sm:$0xff]
    %v754 = vld [vmem:[#allocation2 + $0x16a8] sm:$0xff]
    %v755 = vld [vmem:[#allocation2 + $0x16b0] sm:$0xff]
    %v756 = vld [vmem:[#allocation2 + $0x16b8] sm:$0xff]
    %v757 = vld [vmem:[#allocation2 + $0x16c0] sm:$0xff]
    %v758 = vld [vmem:[#allocation2 + $0x16c8] sm:$0xff]
    %v759 = vld [vmem:[#allocation2 + $0x16d0] sm:$0xff]
    %v760 = vld [vmem:[#allocation2 + $0x16d8] sm:$0xff]
    %v761 = vld [vmem:[#allocation2 + $0x16e0] sm:$0xff]
    %v762 = vld [vmem:[#allocation2 + $0x16e8] sm:$0xff]
    %v763 = vld [vmem:[#allocation2 + $0x16f0] sm:$0xff]
    %v764 = vld [vmem:[#allocation2 + $0x16f8] sm:$0xff]
    %v765 = vld [vmem:[#allocation2 + $0x1700] sm:$0xff]
    %v766 = vld [vmem:[#allocation2 + $0x1708] sm:$0xff]
    %v767 = vld [vmem:[#allocation2 + $0x1710] sm:$0xff]
    %v768 = vld [vmem:[#allocation2 + $0x1718] sm:$0xff]
    %v769 = vld [vmem:[#allocation2 + $0x1720] sm:$0xff]
    %v770 = vld [vmem:[#allocation2 + $0x1728] sm:$0xff]
    %v771 = vld [vmem:[#allocation2 + $0x1730] sm:$0xff]
    %v772 = vld [vmem:[#allocation2 + $0x1738] sm:$0xff]
    %v773 = vld [vmem:[#allocation2 + $0x1740] sm:$0xff]
    %v774 = vld [vmem:[#allocation2 + $0x1748] sm:$0xff]
    %v775 = vld [vmem:[#allocation2 + $0x1750] sm:$0xff]
    %v776 = vld [vmem:[#allocation2 + $0x1758] sm:$0xff]
    %v777 = vld [vmem:[#allocation2 + $0x1760] sm:$0xff]
    %v778 = vld [vmem:[#allocation2 + $0x1768] sm:$0xff]
    %v779 = vld [vmem:[#allocation2 + $0x1770] sm:$0xff]
    %v780 = vld [vmem:[#allocation2 + $0x1778] sm:$0xff]
    %v781 = vld [vmem:[#allocation2 + $0x1780] sm:$0xff]
    %v782 = vld [vmem:[#allocation2 + $0x1788] sm:$0xff]
    %v783 = vld [vmem:[#allocation2 + $0x1790] sm:$0xff]
    %v784 = vld [vmem:[#allocation2 + $0x1798] sm:$0xff]
    %v785 = vld [vmem:[#allocation2 + $0x17a0] sm:$0xff]
    %v786 = vld [vmem:[#allocation2 + $0x17a8] sm:$0xff]
    %v787 = vld [vmem:[#allocation2 + $0x17b0] sm:$0xff]
    %v788 = vld [vmem:[#allocation2 + $0x17b8] sm:$0xff]
    %v789 = vld [vmem:[#allocation2 + $0x17c0] sm:$0xff]
    %v790 = vld [vmem:[#allocation2 + $0x17c8] sm:$0xff]
    %v791 = vld [vmem:[#allocation2 + $0x17d0] sm:$0xff]
    %v792 = vld [vmem:[#allocation2 + $0x17d8] sm:$0xff]
    %v793 = vld [vmem:[#allocation2 + $0x17e0] sm:$0xff]
    %v794 = vld [vmem:[#allocation2 + $0x17e8] sm:$0xff]
    %v795 = vld [vmem:[#allocation2 + $0x17f0] sm:$0xff]
    %v796 = vld [vmem:[#allocation2 + $0x17f8] sm:$0xff]
    %v797 = vld [vmem:[#allocation2 + $0x1800] sm:$0xff]
    %v798 = vld [vmem:[#allocation2 + $0x1808] sm:$0xff]
    %v799 = vld [vmem:[#allocation2 + $0x1810] sm:$0xff]
    %v800 = vld [vmem:[#allocation2 + $0x1818] sm:$0xff]
    %v801 = vld [vmem:[#allocation2 + $0x1820] sm:$0xff]
    %v802 = vld [vmem:[#allocation2 + $0x1828] sm:$0xff]
    %v803 = vld [vmem:[#allocation2 + $0x1830] sm:$0xff]
    %v804 = vld [vmem:[#allocation2 + $0x1838] sm:$0xff]
    %v805 = vld [vmem:[#allocation2 + $0x1840] sm:$0xff]
    %v806 = vld [vmem:[#allocation2 + $0x1848] sm:$0xff]
    %v807 = vld [vmem:[#allocation2 + $0x1850] sm:$0xff]
    %v808 = vld [vmem:[#allocation2 + $0x1858] sm:$0xff]
    %v809 = vld [vmem:[#allocation2 + $0x1860] sm:$0xff]
    %v810 = vld [vmem:[#allocation2 + $0x1868] sm:$0xff]
    %v811 = vld [vmem:[#allocation2 + $0x1870] sm:$0xff]
    %v812 = vld [vmem:[#allocation2 + $0x1878] sm:$0xff]
    %v813 = vld [vmem:[#allocation2 + $0x1880] sm:$0xff]
    %v814 = vld [vmem:[#allocation2 + $0x1888] sm:$0xff]
    %v815 = vld [vmem:[#allocation2 + $0x1890] sm:$0xff]
    %v816 = vld [vmem:[#allocation2 + $0x1898] sm:$0xff]
    %v817 = vld [vmem:[#allocation2 + $0x18a0] sm:$0xff]
    %v818 = vld [vmem:[#allocation2 + $0x18a8] sm:$0xff]
    %v819 = vld [vmem:[#allocation2 + $0x18b0] sm:$0xff]
    %v820 = vld [vmem:[#allocation2 + $0x18b8] sm:$0xff]
    %v821 = vld [vmem:[#allocation2 + $0x18c0] sm:$0xff]
    %v822 = vld [vmem:[#allocation2 + $0x18c8] sm:$0xff]
    %v823 = vld [vmem:[#allocation2 + $0x18d0] sm:$0xff]
    %v824 = vld [vmem:[#allocation2 + $0x18d8] sm:$0xff]
    %v825 = vld [vmem:[#allocation2 + $0x18e0] sm:$0xff]
    %v826 = vld [vmem:[#allocation2 + $0x18e8] sm:$0xff]
    %v827 = vld [vmem:[#allocation2 + $0x18f0] sm:$0xff]
    %v828 = vld [vmem:[#allocation2 + $0x18f8] sm:$0xff]
    %v829 = vld [vmem:[#allocation2 + $0x1900] sm:$0xff]
    %v830 = vld [vmem:[#allocation2 + $0x1908] sm:$0xff]
    %v831 = vld [vmem:[#allocation2 + $0x1910] sm:$0xff]
    %v832 = vld [vmem:[#allocation2 + $0x1918] sm:$0xff]
    %v833 = vld [vmem:[#allocation2 + $0x1920] sm:$0xff]
    %v834 = vld [vmem:[#allocation2 + $0x1928] sm:$0xff]
    %v835 = vld [vmem:[#allocation2 + $0x1930] sm:$0xff]
    %v836 = vld [vmem:[#allocation2 + $0x1938] sm:$0xff]
    %v837 = vld [vmem:[#allocation2 + $0x1940] sm:$0xff]
    %v838 = vld [vmem:[#allocation2 + $0x1948] sm:$0xff]
    %v839 = vld [vmem:[#allocation2 + $0x1950] sm:$0xff]
    %v840 = vld [vmem:[#allocation2 + $0x1958] sm:$0xff]
    %v841 = vld [vmem:[#allocation2 + $0x1960] sm:$0xff]
    %v842 = vld [vmem:[#allocation2 + $0x1968] sm:$0xff]
    %v843 = vld [vmem:[#allocation2 + $0x1970] sm:$0xff]
    %v844 = vld [vmem:[#allocation2 + $0x1978] sm:$0xff]
    %v845 = vld [vmem:[#allocation2 + $0x1980] sm:$0xff]
    %v846 = vld [vmem:[#allocation2 + $0x1988] sm:$0xff]
    %v847 = vld [vmem:[#allocation2 + $0x1990] sm:$0xff]
    %v848 = vld [vmem:[#allocation2 + $0x1998] sm:$0xff]
    %v849 = vld [vmem:[#allocation2 + $0x19a0] sm:$0xff]
    %v850 = vld [vmem:[#allocation2 + $0x19a8] sm:$0xff]
    %v851 = vld [vmem:[#allocation2 + $0x19b0] sm:$0xff]
    %v852 = vld [vmem:[#allocation2 + $0x19b8] sm:$0xff]
    %v853 = vld [vmem:[#allocation2 + $0x19c0] sm:$0xff]
    %v854 = vld [vmem:[#allocation2 + $0x19c8] sm:$0xff]
    %v855 = vld [vmem:[#allocation2 + $0x19d0] sm:$0xff]
    %v856 = vld [vmem:[#allocation2 + $0x19d8] sm:$0xff]
    %v857 = vld [vmem:[#allocation2 + $0x19e0] sm:$0xff]
    %v858 = vld [vmem:[#allocation2 + $0x19e8] sm:$0xff]
    %v859 = vld [vmem:[#allocation2 + $0x19f0] sm:$0xff]
    %v860 = vld [vmem:[#allocation2 + $0x19f8] sm:$0xff]
    %v861 = vld [vmem:[#allocation2 + $0x1a00] sm:$0xff]
    %v862 = vld [vmem:[#allocation2 + $0x1a08] sm:$0xff]
    %v863 = vld [vmem:[#allocation2 + $0x1a10] sm:$0xff]
    %v864 = vld [vmem:[#allocation2 + $0x1a18] sm:$0xff]
    %v865 = vld [vmem:[#allocation2 + $0x1a20] sm:$0xff]
    %v866 = vld [vmem:[#allocation2 + $0x1a28] sm:$0xff]
    %v867 = vld [vmem:[#allocation2 + $0x1a30] sm:$0xff]
    %v868 = vld [vmem:[#allocation2 + $0x1a38] sm:$0xff]
    %v869 = vld [vmem:[#allocation2 + $0x1a40] sm:$0xff]
    %v870 = vld [vmem:[#allocation2 + $0x1a48] sm:$0xff]
    %v871 = vld [vmem:[#allocation2 + $0x1a50] sm:$0xff]
    %v872 = vld [vmem:[#allocation2 + $0x1a58] sm:$0xff]
    %v873 = vld [vmem:[#allocation2 + $0x1a60] sm:$0xff]
    %v874 = vld [vmem:[#allocation2 + $0x1a68] sm:$0xff]
    %v875 = vld [vmem:[#allocation2 + $0x1a70] sm:$0xff]
    %v876 = vld [vmem:[#allocation2 + $0x1a78] sm:$0xff]
    %v877 = vld [vmem:[#allocation2 + $0x1a80] sm:$0xff]
    %v878 = vld [vmem:[#allocation2 + $0x1a88] sm:$0xff]
    %v879 = vld [vmem:[#allocation2 + $0x1a90] sm:$0xff]
    %v880 = vld [vmem:[#allocation2 + $0x1a98] sm:$0xff]
    %v881 = vld [vmem:[#allocation2 + $0x1aa0] sm:$0xff]
    %v882 = vld [vmem:[#allocation2 + $0x1aa8] sm:$0xff]
    %v883 = vld [vmem:[#allocation2 + $0x1ab0] sm:$0xff]
    %v884 = vld [vmem:[#allocation2 + $0x1ab8] sm:$0xff]
    %v885 = vld [vmem:[#allocation2 + $0x1ac0] sm:$0xff]
    %v886 = vld [vmem:[#allocation2 + $0x1ac8] sm:$0xff]
    %v887 = vld [vmem:[#allocation2 + $0x1ad0] sm:$0xff]
    %v888 = vld [vmem:[#allocation2 + $0x1ad8] sm:$0xff]
    %v889 = vld [vmem:[#allocation2 + $0x1ae0] sm:$0xff]
    %v890 = vld [vmem:[#allocation2 + $0x1ae8] sm:$0xff]
    %v891 = vld [vmem:[#allocation2 + $0x1af0] sm:$0xff]
    %v892 = vld [vmem:[#allocation2 + $0x1af8] sm:$0xff]
    %v893 = vld [vmem:[#allocation2 + $0x1b00] sm:$0xff]
    %v894 = vld [vmem:[#allocation2 + $0x1b08] sm:$0xff]
    %v895 = vld [vmem:[#allocation2 + $0x1b10] sm:$0xff]
    %v896 = vld [vmem:[#allocation2 + $0x1b18] sm:$0xff]
    %v897 = vld [vmem:[#allocation2 + $0x1b20] sm:$0xff]
    %v898 = vld [vmem:[#allocation2 + $0x1b28] sm:$0xff]
    %v899 = vld [vmem:[#allocation2 + $0x1b30] sm:$0xff]
    %v900 = vld [vmem:[#allocation2 + $0x1b38] sm:$0xff]
    %v901 = vld [vmem:[#allocation2 + $0x1b40] sm:$0xff]
    %v902 = vld [vmem:[#allocation2 + $0x1b48] sm:$0xff]
    %v903 = vld [vmem:[#allocation2 + $0x1b50] sm:$0xff]
    %v904 = vld [vmem:[#allocation2 + $0x1b58] sm:$0xff]
    %v905 = vld [vmem:[#allocation2 + $0x1b60] sm:$0xff]
    %v906 = vld [vmem:[#allocation2 + $0x1b68] sm:$0xff]
    %v907 = vld [vmem:[#allocation2 + $0x1b70] sm:$0xff]
    %v908 = vld [vmem:[#allocation2 + $0x1b78] sm:$0xff]
    %v909 = vld [vmem:[#allocation2 + $0x1b80] sm:$0xff]
    %v910 = vld [vmem:[#allocation2 + $0x1b88] sm:$0xff]
    %v911 = vld [vmem:[#allocation2 + $0x1b90] sm:$0xff]
    %v912 = vld [vmem:[#allocation2 + $0x1b98] sm:$0xff]
    %v913 = vld [vmem:[#allocation2 + $0x1ba0] sm:$0xff]
    %v914 = vld [vmem:[#allocation2 + $0x1ba8] sm:$0xff]
    %v915 = vld [vmem:[#allocation2 + $0x1bb0] sm:$0xff]
    %v916 = vld [vmem:[#allocation2 + $0x1bb8] sm:$0xff]
    %v917 = vld [vmem:[#allocation2 + $0x1bc0] sm:$0xff]
    %v918 = vld [vmem:[#allocation2 + $0x1bc8] sm:$0xff]
    %v919 = vld [vmem:[#allocation2 + $0x1bd0] sm:$0xff]
    %v920 = vld [vmem:[#allocation2 + $0x1bd8] sm:$0xff]
    %v921 = vld [vmem:[#allocation2 + $0x1be0] sm:$0xff]
    %v922 = vld [vmem:[#allocation2 + $0x1be8] sm:$0xff]
    %v923 = vld [vmem:[#allocation2 + $0x1bf0] sm:$0xff]
    %v924 = vld [vmem:[#allocation2 + $0x1bf8] sm:$0xff]
    %v925 = vld [vmem:[#allocation2 + $0x1c00] sm:$0xff]
    %v926 = vld [vmem:[#allocation2 + $0x1c08] sm:$0xff]
    %v927 = vld [vmem:[#allocation2 + $0x1c10] sm:$0xff]
    %v928 = vld [vmem:[#allocation2 + $0x1c18] sm:$0xff]
    %v929 = vld [vmem:[#allocation2 + $0x1c20] sm:$0xff]
    %v930 = vld [vmem:[#allocation2 + $0x1c28] sm:$0xff]
    %v931 = vld [vmem:[#allocation2 + $0x1c30] sm:$0xff]
    %v932 = vld [vmem:[#allocation2 + $0x1c38] sm:$0xff]
    %v933 = vld [vmem:[#allocation2 + $0x1c40] sm:$0xff]
    %v934 = vld [vmem:[#allocation2 + $0x1c48] sm:$0xff]
    %v935 = vld [vmem:[#allocation2 + $0x1c50] sm:$0xff]
    %v936 = vld [vmem:[#allocation2 + $0x1c58] sm:$0xff]
    %v937 = vld [vmem:[#allocation2 + $0x1c60] sm:$0xff]
    %v938 = vld [vmem:[#allocation2 + $0x1c68] sm:$0xff]
    %v939 = vld [vmem:[#allocation2 + $0x1c70] sm:$0xff]
    %v940 = vld [vmem:[#allocation2 + $0x1c78] sm:$0xff]
    %v941 = vld [vmem:[#allocation2 + $0x1c80] sm:$0xff]
    %v942 = vld [vmem:[#allocation2 + $0x1c88] sm:$0xff]
    %v943 = vld [vmem:[#allocation2 + $0x1c90] sm:$0xff]
    %v944 = vld [vmem:[#allocation2 + $0x1c98] sm:$0xff]
    %v945 = vld [vmem:[#allocation2 + $0x1ca0] sm:$0xff]
    %v946 = vld [vmem:[#allocation2 + $0x1ca8] sm:$0xff]
    %v947 = vld [vmem:[#allocation2 + $0x1cb0] sm:$0xff]
    %v948 = vld [vmem:[#allocation2 + $0x1cb8] sm:$0xff]
    %v949 = vld [vmem:[#allocation2 + $0x1cc0] sm:$0xff]
    %v950 = vld [vmem:[#allocation2 + $0x1cc8] sm:$0xff]
    %v951 = vld [vmem:[#allocation2 + $0x1cd0] sm:$0xff]
    %v952 = vld [vmem:[#allocation2 + $0x1cd8] sm:$0xff]
    %v953 = vld [vmem:[#allocation2 + $0x1ce0] sm:$0xff]
    %v954 = vld [vmem:[#allocation2 + $0x1ce8] sm:$0xff]
    %v955 = vld [vmem:[#allocation2 + $0x1cf0] sm:$0xff]
    %v956 = vld [vmem:[#allocation2 + $0x1cf8] sm:$0xff]
    %v957 = vld [vmem:[#allocation2 + $0x1d00] sm:$0xff]
    %v958 = vld [vmem:[#allocation2 + $0x1d08] sm:$0xff]
    %v959 = vld [vmem:[#allocation2 + $0x1d10] sm:$0xff]
    %v960 = vld [vmem:[#allocation2 + $0x1d18] sm:$0xff]
    %v961 = vld [vmem:[#allocation2 + $0x1d20] sm:$0xff]
    %v962 = vld [vmem:[#allocation2 + $0x1d28] sm:$0xff]
    %v963 = vld [vmem:[#allocation2 + $0x1d30] sm:$0xff]
    %v964 = vld [vmem:[#allocation2 + $0x1d38] sm:$0xff]
    %v965 = vld [vmem:[#allocation2 + $0x1d40] sm:$0xff]
    %v966 = vld [vmem:[#allocation2 + $0x1d48] sm:$0xff]
    %v967 = vld [vmem:[#allocation2 + $0x1d50] sm:$0xff]
    %v968 = vld [vmem:[#allocation2 + $0x1d58] sm:$0xff]
    %v969 = vld [vmem:[#allocation2 + $0x1d60] sm:$0xff]
    %v970 = vld [vmem:[#allocation2 + $0x1d68] sm:$0xff]
    %v971 = vld [vmem:[#allocation2 + $0x1d70] sm:$0xff]
    %v972 = vld [vmem:[#allocation2 + $0x1d78] sm:$0xff]
    %v973 = vld [vmem:[#allocation2 + $0x1d80] sm:$0xff]
    %v974 = vld [vmem:[#allocation2 + $0x1d88] sm:$0xff]
    %v975 = vld [vmem:[#allocation2 + $0x1d90] sm:$0xff]
    %v976 = vld [vmem:[#allocation2 + $0x1d98] sm:$0xff]
    %v977 = vld [vmem:[#allocation2 + $0x1da0] sm:$0xff]
    %v978 = vld [vmem:[#allocation2 + $0x1da8] sm:$0xff]
    %v979 = vld [vmem:[#allocation2 + $0x1db0] sm:$0xff]
    %v980 = vld [vmem:[#allocation2 + $0x1db8] sm:$0xff]
    %v981 = vld [vmem:[#allocation2 + $0x1dc0] sm:$0xff]
    %v982 = vld [vmem:[#allocation2 + $0x1dc8] sm:$0xff]
    %v983 = vld [vmem:[#allocation2 + $0x1dd0] sm:$0xff]
    %v984 = vld [vmem:[#allocation2 + $0x1dd8] sm:$0xff]
    %v985 = vld [vmem:[#allocation2 + $0x1de0] sm:$0xff]
    %v986 = vld [vmem:[#allocation2 + $0x1de8] sm:$0xff]
    %v987 = vld [vmem:[#allocation2 + $0x1df0] sm:$0xff]
    %v988 = vld [vmem:[#allocation2 + $0x1df8] sm:$0xff]
    %v989 = vld [vmem:[#allocation2 + $0x1e00] sm:$0xff]
    %v990 = vld [vmem:[#allocation2 + $0x1e08] sm:$0xff]
    %v991 = vld [vmem:[#allocation2 + $0x1e10] sm:$0xff]
    %v992 = vld [vmem:[#allocation2 + $0x1e18] sm:$0xff]
    %v993 = vld [vmem:[#allocation2 + $0x1e20] sm:$0xff]
    %v994 = vld [vmem:[#allocation2 + $0x1e28] sm:$0xff]
    %v995 = vld [vmem:[#allocation2 + $0x1e30] sm:$0xff]
    %v996 = vld [vmem:[#allocation2 + $0x1e38] sm:$0xff]
    %v997 = vld [vmem:[#allocation2 + $0x1e40] sm:$0xff]
    %v998 = vld [vmem:[#allocation2 + $0x1e48] sm:$0xff]
    %v999 = vld [vmem:[#allocation2 + $0x1e50] sm:$0xff]
    %v1000 = vld [vmem:[#allocation2 + $0x1e58] sm:$0xff]
    %v1001 = vld [vmem:[#allocation2 + $0x1e60] sm:$0xff]
    %v1002 = vld [vmem:[#allocation2 + $0x1e68] sm:$0xff]
    %v1003 = vld [vmem:[#allocation2 + $0x1e70] sm:$0xff]
    %v1004 = vld [vmem:[#allocation2 + $0x1e78] sm:$0xff]
    %v1005 = vld [vmem:[#allocation2 + $0x1e80] sm:$0xff]
    %v1006 = vld [vmem:[#allocation2 + $0x1e88] sm:$0xff]
    %v1007 = vld [vmem:[#allocation2 + $0x1e90] sm:$0xff]
    %v1008 = vld [vmem:[#allocation2 + $0x1e98] sm:$0xff]
    %v1009 = vld [vmem:[#allocation2 + $0x1ea0] sm:$0xff]
    %v1010 = vld [vmem:[#allocation2 + $0x1ea8] sm:$0xff]
    %v1011 = vld [vmem:[#allocation2 + $0x1eb0] sm:$0xff]
    %v1012 = vld [vmem:[#allocation2 + $0x1eb8] sm:$0xff]
    %v1013 = vld [vmem:[#allocation2 + $0x1ec0] sm:$0xff]
    %v1014 = vld [vmem:[#allocation2 + $0x1ec8] sm:$0xff]
    %v1015 = vld [vmem:[#allocation2 + $0x1ed0] sm:$0xff]
    %v1016 = vld [vmem:[#allocation2 + $0x1ed8] sm:$0xff]
    %v1017 = vld [vmem:[#allocation2 + $0x1ee0] sm:$0xff]
    %v1018 = vld [vmem:[#allocation2 + $0x1ee8] sm:$0xff]
    %v1019 = vld [vmem:[#allocation2 + $0x1ef0] sm:$0xff]
    %v1020 = vld [vmem:[#allocation2 + $0x1ef8] sm:$0xff]
    %v1021 = vld [vmem:[#allocation2 + $0x1f00] sm:$0xff]
    %v1022 = vld [vmem:[#allocation2 + $0x1f08] sm:$0xff]
    %v1023 = vld [vmem:[#allocation2 + $0x1f10] sm:$0xff]
    %v1024 = vld [vmem:[#allocation2 + $0x1f18] sm:$0xff]
    %v1025 = vld [vmem:[#allocation2 + $0x1f20] sm:$0xff]
    %v1026 = vld [vmem:[#allocation2 + $0x1f28] sm:$0xff]
    %v1027 = vld [vmem:[#allocation2 + $0x1f30] sm:$0xff]
    %v1028 = vld [vmem:[#allocation2 + $0x1f38] sm:$0xff]
    %v1029 = vld [vmem:[#allocation2 + $0x1f40] sm:$0xff]
    %v1030 = vld [vmem:[#allocation2 + $0x1f48] sm:$0xff]
    %v1031 = vld [vmem:[#allocation2 + $0x1f50] sm:$0xff]
    %v1032 = vld [vmem:[#allocation2 + $0x1f58] sm:$0xff]
    %v1033 = vld [vmem:[#allocation2 + $0x1f60] sm:$0xff]
    %v1034 = vld [vmem:[#allocation2 + $0x1f68] sm:$0xff]
    %v1035 = vld [vmem:[#allocation2 + $0x1f70] sm:$0xff]
    %v1036 = vld [vmem:[#allocation2 + $0x1f78] sm:$0xff]
    %v1037 = vld [vmem:[#allocation2 + $0x1f80] sm:$0xff]
    %v1038 = vld [vmem:[#allocation2 + $0x1f88] sm:$0xff]
    %v1039 = vld [vmem:[#allocation2 + $0x1f90] sm:$0xff]
    %v1040 = vld [vmem:[#allocation2 + $0x1f98] sm:$0xff]
    %v1041 = vld [vmem:[#allocation2 + $0x1fa0] sm:$0xff]
    %v1042 = vld [vmem:[#allocation2 + $0x1fa8] sm:$0xff]
    %v1043 = vld [vmem:[#allocation2 + $0x1fb0] sm:$0xff]
    %v1044 = vld [vmem:[#allocation2 + $0x1fb8] sm:$0xff]
    %v1045 = vld [vmem:[#allocation2 + $0x1fc0] sm:$0xff]
    %v1046 = vld [vmem:[#allocation2 + $0x1fc8] sm:$0xff]
    %v1047 = vld [vmem:[#allocation2 + $0x1fd0] sm:$0xff]
    %v1048 = vld [vmem:[#allocation2 + $0x1fd8] sm:$0xff]
    %v1049 = vld [vmem:[#allocation2 + $0x1fe0] sm:$0xff]
    %v1050 = vld [vmem:[#allocation2 + $0x1fe8] sm:$0xff]
    %v1051 = vld [vmem:[#allocation2 + $0x1ff0] sm:$0xff]
    %v1052 = vld [vmem:[#allocation2 + $0x1ff8] sm:$0xff]
    %v1053 = vld [vmem:[#allocation5] sm:$0xff]
    %v1054 = vld [vmem:[#allocation5 + $0x8] sm:$0xff]
    %v1055 = vadd.f32 %v29, %v31
    %v1056 = vadd.f32 %v1055, %v33
    %v1057 = vadd.f32 %v1056, %v35
    %v1058 = vadd.f32 %v1057, %v37
    %v1059 = vadd.f32 %v1058, %v39
    %v1060 = vadd.f32 %v1059, %v41
    %v1061 = vadd.f32 %v1060, %v43
    %v1062 = vadd.f32 %v1061, %v45
    %v1063 = vadd.f32 %v1062, %v47
    %v1064 = vadd.f32 %v1063, %v49
    %v1065 = vadd.f32 %v1064, %v51
    %v1066 = vadd.f32 %v1065, %v53
    %v1067 = vadd.f32 %v1066, %v55
    %v1068 = vadd.f32 %v1067, %v57
    %v1069 = vadd.f32 %v1068, %v59
    %v1070 = vadd.f32 %v1069, %v61
    %v1071 = vadd.f32 %v1070, %v63
    %v1072 = vadd.f32 %v1071, %v65
    %v1073 = vadd.f32 %v1072, %v67
    %v1074 = vadd.f32 %v1073, %v69
    %v1075 = vadd.f32 %v1074, %v71
    %v1076 = vadd.f32 %v1075, %v73
    %v1077 = vadd.f32 %v1076, %v75
    %v1078 = vadd.f32 %v1077, %v77
    %v1079 = vadd.f32 %v1078, %v79
    %v1080 = vadd.f32 %v1079, %v81
    %v1081 = vadd.f32 %v1080, %v83
    %v1082 = vadd.f32 %v1081, %v85
    %v1083 = vadd.f32 %v1082, %v87
    %v1084 = vadd.f32 %v1083, %v89
    %v1085 = vadd.f32 %v1084, %v91
    %v1086 = vadd.f32 %v1085, %v93
    %v1087 = vadd.f32 %v1086, %v95
    %v1088 = vadd.f32 %v1087, %v97
    %v1089 = vadd.f32 %v1088, %v99
    %v1090 = vadd.f32 %v1089, %v101
    %v1091 = vadd.f32 %v1090, %v103
    %v1092 = vadd.f32 %v1091, %v105
    %v1093 = vadd.f32 %v1092, %v107
    %v1094 = vadd.f32 %v1093, %v109
    %v1095 = vadd.f32 %v1094, %v111
    %v1096 = vadd.f32 %v1095, %v113
    %v1097 = vadd.f32 %v1096, %v115
    %v1098 = vadd.f32 %v1097, %v117
    %v1099 = vadd.f32 %v1098, %v119
    %v1100 = vadd.f32 %v1099, %v121
    %v1101 = vadd.f32 %v1100, %v123
    %v1102 = vadd.f32 %v1101, %v125
    %v1103 = vadd.f32 %v1102, %v127
    %v1104 = vadd.f32 %v1103, %v129
    %v1105 = vadd.f32 %v1104, %v131
    %v1106 = vadd.f32 %v1105, %v133
    %v1107 = vadd.f32 %v1106, %v135
    %v1108 = vadd.f32 %v1107, %v137
    %v1109 = vadd.f32 %v1108, %v139
    %v1110 = vadd.f32 %v1109, %v141
    %v1111 = vadd.f32 %v1110, %v143
    %v1112 = vadd.f32 %v1111, %v145
    %v1113 = vadd.f32 %v1112, %v147
    %v1114 = vadd.f32 %v1113, %v149
    %v1115 = vadd.f32 %v1114, %v151
    %v1116 = vadd.f32 %v1115, %v153
    %v1117 = vadd.f32 %v1116, %v155
    %v1118 = vrot.slane %v1117, 4
    %v1119 = vadd.f32 %v1117, %v1118
    %v1120 = vrot.slane %v1119, 2
    %v1121 = vadd.f32 %v1119, %v1120
    %v1122 = vrot.slane %v1121, 1
    %v1123 = vadd.f32 %v1121, %v1122
    %v1124 = vadd.f32 %v30, %v32
    %v1125 = vadd.f32 %v1124, %v34
    %v1126 = vadd.f32 %v1125, %v36
    %v1127 = vadd.f32 %v1126, %v38
    %v1128 = vadd.f32 %v1127, %v40
    %v1129 = vadd.f32 %v1128, %v42
    %v1130 = vadd.f32 %v1129, %v44
    %v1131 = vadd.f32 %v1130, %v46
    %v1132 = vadd.f32 %v1131, %v48
    %v1133 = vadd.f32 %v1132, %v50
    %v1134 = vadd.f32 %v1133, %v52
    %v1135 = vadd.f32 %v1134, %v54
    %v1136 = vadd.f32 %v1135, %v56
    %v1137 = vadd.f32 %v1136, %v58
    %v1138 = vadd.f32 %v1137, %v60
    %v1139 = vadd.f32 %v1138, %v62
    %v1140 = vadd.f32 %v1139, %v64
    %v1141 = vadd.f32 %v1140, %v66
    %v1142 = vadd.f32 %v1141, %v68
    %v1143 = vadd.f32 %v1142, %v70
    %v1144 = vadd.f32 %v1143, %v72
    %v1145 = vadd.f32 %v1144, %v74
    %v1146 = vadd.f32 %v1145, %v76
    %v1147 = vadd.f32 %v1146, %v78
    %v1148 = vadd.f32 %v1147, %v80
    %v1149 = vadd.f32 %v1148, %v82
    %v1150 = vadd.f32 %v1149, %v84
    %v1151 = vadd.f32 %v1150, %v86
    %v1152 = vadd.f32 %v1151, %v88
    %v1153 = vadd.f32 %v1152, %v90
    %v1154 = vadd.f32 %v1153, %v92
    %v1155 = vadd.f32 %v1154, %v94
    %v1156 = vadd.f32 %v1155, %v96
    %v1157 = vadd.f32 %v1156, %v98
    %v1158 = vadd.f32 %v1157, %v100
    %v1159 = vadd.f32 %v1158, %v102
    %v1160 = vadd.f32 %v1159, %v104
    %v1161 = vadd.f32 %v1160, %v106
    %v1162 = vadd.f32 %v1161, %v108
    %v1163 = vadd.f32 %v1162, %v110
    %v1164 = vadd.f32 %v1163, %v112
    %v1165 = vadd.f32 %v1164, %v114
    %v1166 = vadd.f32 %v1165, %v116
    %v1167 = vadd.f32 %v1166, %v118
    %v1168 = vadd.f32 %v1167, %v120
    %v1169 = vadd.f32 %v1168, %v122
    %v1170 = vadd.f32 %v1169, %v124
    %v1171 = vadd.f32 %v1170, %v126
    %v1172 = vadd.f32 %v1171, %v128
    %v1173 = vadd.f32 %v1172, %v130
    %v1174 = vadd.f32 %v1173, %v132
    %v1175 = vadd.f32 %v1174, %v134
    %v1176 = vadd.f32 %v1175, %v136
    %v1177 = vadd.f32 %v1176, %v138
    %v1178 = vadd.f32 %v1177, %v140
    %v1179 = vadd.f32 %v1178, %v142
    %v1180 = vadd.f32 %v1179, %v144
    %v1181 = vadd.f32 %v1180, %v146
    %v1182 = vadd.f32 %v1181, %v148
    %v1183 = vadd.f32 %v1182, %v150
    %v1184 = vadd.f32 %v1183, %v152
    %v1185 = vadd.f32 %v1184, %v154
    %v1186 = vadd.f32 %v1185, %v156
    %v1187 = vrot.slane %v1186, 4
    %v1188 = vadd.f32 %v1186, %v1187
    %v1189 = vrot.slane %v1188, 2
    %v1190 = vadd.f32 %v1188, %v1189
    %v1191 = vrot.slane %v1190, 1
    %v1192 = vadd.f32 %v1190, %v1191
    %v1193 = vadd.f32 %v157, %v159
    %v1194 = vadd.f32 %v1193, %v161
    %v1195 = vadd.f32 %v1194, %v163
    %v1196 = vadd.f32 %v1195, %v165
    %v1197 = vadd.f32 %v1196, %v167
    %v1198 = vadd.f32 %v1197, %v169
    %v1199 = vadd.f32 %v1198, %v171
    %v1200 = vadd.f32 %v1199, %v173
    %v1201 = vadd.f32 %v1200, %v175
    %v1202 = vadd.f32 %v1201, %v177
    %v1203 = vadd.f32 %v1202, %v179
    %v1204 = vadd.f32 %v1203, %v181
    %v1205 = vadd.f32 %v1204, %v183
    %v1206 = vadd.f32 %v1205, %v185
    %v1207 = vadd.f32 %v1206, %v187
    %v1208 = vadd.f32 %v1207, %v189
    %v1209 = vadd.f32 %v1208, %v191
    %v1210 = vadd.f32 %v1209, %v193
    %v1211 = vadd.f32 %v1210, %v195
    %v1212 = vadd.f32 %v1211, %v197
    %v1213 = vadd.f32 %v1212, %v199
    %v1214 = vadd.f32 %v1213, %v201
    %v1215 = vadd.f32 %v1214, %v203
    %v1216 = vadd.f32 %v1215, %v205
    %v1217 = vadd.f32 %v1216, %v207
    %v1218 = vadd.f32 %v1217, %v209
    %v1219 = vadd.f32 %v1218, %v211
    %v1220 = vadd.f32 %v1219, %v213
    %v1221 = vadd.f32 %v1220, %v215
    %v1222 = vadd.f32 %v1221, %v217
    %v1223 = vadd.f32 %v1222, %v219
    %v1224 = vadd.f32 %v1223, %v221
    %v1225 = vadd.f32 %v1224, %v223
    %v1226 = vadd.f32 %v1225, %v225
    %v1227 = vadd.f32 %v1226, %v227
    %v1228 = vadd.f32 %v1227, %v229
    %v1229 = vadd.f32 %v1228, %v231
    %v1230 = vadd.f32 %v1229, %v233
    %v1231 = vadd.f32 %v1230, %v235
    %v1232 = vadd.f32 %v1231, %v237
    %v1233 = vadd.f32 %v1232, %v239
    %v1234 = vadd.f32 %v1233, %v241
    %v1235 = vadd.f32 %v1234, %v243
    %v1236 = vadd.f32 %v1235, %v245
    %v1237 = vadd.f32 %v1236, %v247
    %v1238 = vadd.f32 %v1237, %v249
    %v1239 = vadd.f32 %v1238, %v251
    %v1240 = vadd.f32 %v1239, %v253
    %v1241 = vadd.f32 %v1240, %v255
    %v1242 = vadd.f32 %v1241, %v257
    %v1243 = vadd.f32 %v1242, %v259
    %v1244 = vadd.f32 %v1243, %v261
    %v1245 = vadd.f32 %v1244, %v263
    %v1246 = vadd.f32 %v1245, %v265
    %v1247 = vadd.f32 %v1246, %v267
    %v1248 = vadd.f32 %v1247, %v269
    %v1249 = vadd.f32 %v1248, %v271
    %v1250 = vadd.f32 %v1249, %v273
    %v1251 = vadd.f32 %v1250, %v275
    %v1252 = vadd.f32 %v1251, %v277
    %v1253 = vadd.f32 %v1252, %v279
    %v1254 = vadd.f32 %v1253, %v281
    %v1255 = vadd.f32 %v1254, %v283
    %v1256 = vrot.slane %v1255, 4
    %v1257 = vadd.f32 %v1255, %v1256
    %v1258 = vrot.slane %v1257, 2
    %v1259 = vadd.f32 %v1257, %v1258
    %v1260 = vrot.slane %v1259, 1
    %v1261 = vadd.f32 %v1259, %v1260
    %v1262 = vadd.f32 %v158, %v160
    %v1263 = vadd.f32 %v1262, %v162
    %v1264 = vadd.f32 %v1263, %v164
    %v1265 = vadd.f32 %v1264, %v166
    %v1266 = vadd.f32 %v1265, %v168
    %v1267 = vadd.f32 %v1266, %v170
    %v1268 = vadd.f32 %v1267, %v172
    %v1269 = vadd.f32 %v1268, %v174
    %v1270 = vadd.f32 %v1269, %v176
    %v1271 = vadd.f32 %v1270, %v178
    %v1272 = vadd.f32 %v1271, %v180
    %v1273 = vadd.f32 %v1272, %v182
    %v1274 = vadd.f32 %v1273, %v184
    %v1275 = vadd.f32 %v1274, %v186
    %v1276 = vadd.f32 %v1275, %v188
    %v1277 = vadd.f32 %v1276, %v190
    %v1278 = vadd.f32 %v1277, %v192
    %v1279 = vadd.f32 %v1278, %v194
    %v1280 = vadd.f32 %v1279, %v196
    %v1281 = vadd.f32 %v1280, %v198
    %v1282 = vadd.f32 %v1281, %v200
    %v1283 = vadd.f32 %v1282, %v202
    %v1284 = vadd.f32 %v1283, %v204
    %v1285 = vadd.f32 %v1284, %v206
    %v1286 = vadd.f32 %v1285, %v208
    %v1287 = vadd.f32 %v1286, %v210
    %v1288 = vadd.f32 %v1287, %v212
    %v1289 = vadd.f32 %v1288, %v214
    %v1290 = vadd.f32 %v1289, %v216
    %v1291 = vadd.f32 %v1290, %v218
    %v1292 = vadd.f32 %v1291, %v220
    %v1293 = vadd.f32 %v1292, %v222
    %v1294 = vadd.f32 %v1293, %v224
    %v1295 = vadd.f32 %v1294, %v226
    %v1296 = vadd.f32 %v1295, %v228
    %v1297 = vadd.f32 %v1296, %v230
    %v1298 = vadd.f32 %v1297, %v232
    %v1299 = vadd.f32 %v1298, %v234
    %v1300 = vadd.f32 %v1299, %v236
    %v1301 = vadd.f32 %v1300, %v238
    %v1302 = vadd.f32 %v1301, %v240
    %v1303 = vadd.f32 %v1302, %v242
    %v1304 = vadd.f32 %v1303, %v244
    %v1305 = vadd.f32 %v1304, %v246
    %v1306 = vadd.f32 %v1305, %v248
    %v1307 = vadd.f32 %v1306, %v250
    %v1308 = vadd.f32 %v1307, %v252
    %v1309 = vadd.f32 %v1308, %v254
    %v1310 = vadd.f32 %v1309, %v256
    %v1311 = vadd.f32 %v1310, %v258
    %v1312 = vadd.f32 %v1311, %v260
    %v1313 = vadd.f32 %v1312, %v262
    %v1314 = vadd.f32 %v1313, %v264
    %v1315 = vadd.f32 %v1314, %v266
    %v1316 = vadd.f32 %v1315, %v268
    %v1317 = vadd.f32 %v1316, %v270
    %v1318 = vadd.f32 %v1317, %v272
    %v1319 = vadd.f32 %v1318, %v274
    %v1320 = vadd.f32 %v1319, %v276
    %v1321 = vadd.f32 %v1320, %v278
    %v1322 = vadd.f32 %v1321, %v280
    %v1323 = vadd.f32 %v1322, %v282
    %v1324 = vadd.f32 %v1323, %v284
    %v1325 = vrot.slane %v1324, 4
    %v1326 = vadd.f32 %v1324, %v1325
    %v1327 = vrot.slane %v1326, 2
    %v1328 = vadd.f32 %v1326, %v1327
    %v1329 = vrot.slane %v1328, 1
    %v1330 = vadd.f32 %v1328, %v1329
    %v1331 = vadd.f32 %v285, %v287
    %v1332 = vadd.f32 %v1331, %v289
    %v1333 = vadd.f32 %v1332, %v291
    %v1334 = vadd.f32 %v1333, %v293
    %v1335 = vadd.f32 %v1334, %v295
    %v1336 = vadd.f32 %v1335, %v297
    %v1337 = vadd.f32 %v1336, %v299
    %v1338 = vadd.f32 %v1337, %v301
    %v1339 = vadd.f32 %v1338, %v303
    %v1340 = vadd.f32 %v1339, %v305
    %v1341 = vadd.f32 %v1340, %v307
    %v1342 = vadd.f32 %v1341, %v309
    %v1343 = vadd.f32 %v1342, %v311
    %v1344 = vadd.f32 %v1343, %v313
    %v1345 = vadd.f32 %v1344, %v315
    %v1346 = vadd.f32 %v1345, %v317
    %v1347 = vadd.f32 %v1346, %v319
    %v1348 = vadd.f32 %v1347, %v321
    %v1349 = vadd.f32 %v1348, %v323
    %v1350 = vadd.f32 %v1349, %v325
    %v1351 = vadd.f32 %v1350, %v327
    %v1352 = vadd.f32 %v1351, %v329
    %v1353 = vadd.f32 %v1352, %v331
    %v1354 = vadd.f32 %v1353, %v333
    %v1355 = vadd.f32 %v1354, %v335
    %v1356 = vadd.f32 %v1355, %v337
    %v1357 = vadd.f32 %v1356, %v339
    %v1358 = vadd.f32 %v1357, %v341
    %v1359 = vadd.f32 %v1358, %v343
    %v1360 = vadd.f32 %v1359, %v345
    %v1361 = vadd.f32 %v1360, %v347
    %v1362 = vadd.f32 %v1361, %v349
    %v1363 = vadd.f32 %v1362, %v351
    %v1364 = vadd.f32 %v1363, %v353
    %v1365 = vadd.f32 %v1364, %v355
    %v1366 = vadd.f32 %v1365, %v357
    %v1367 = vadd.f32 %v1366, %v359
    %v1368 = vadd.f32 %v1367, %v361
    %v1369 = vadd.f32 %v1368, %v363
    %v1370 = vadd.f32 %v1369, %v365
    %v1371 = vadd.f32 %v1370, %v367
    %v1372 = vadd.f32 %v1371, %v369
    %v1373 = vadd.f32 %v1372, %v371
    %v1374 = vadd.f32 %v1373, %v373
    %v1375 = vadd.f32 %v1374, %v375
    %v1376 = vadd.f32 %v1375, %v377
    %v1377 = vadd.f32 %v1376, %v379
    %v1378 = vadd.f32 %v1377, %v381
    %v1379 = vadd.f32 %v1378, %v383
    %v1380 = vadd.f32 %v1379, %v385
    %v1381 = vadd.f32 %v1380, %v387
    %v1382 = vadd.f32 %v1381, %v389
    %v1383 = vadd.f32 %v1382, %v391
    %v1384 = vadd.f32 %v1383, %v393
    %v1385 = vadd.f32 %v1384, %v395
    %v1386 = vadd.f32 %v1385, %v397
    %v1387 = vadd.f32 %v1386, %v399
    %v1388 = vadd.f32 %v1387, %v401
    %v1389 = vadd.f32 %v1388, %v403
    %v1390 = vadd.f32 %v1389, %v405
    %v1391 = vadd.f32 %v1390, %v407
    %v1392 = vadd.f32 %v1391, %v409
    %v1393 = vadd.f32 %v1392, %v411
    %v1394 = vrot.slane %v1393, 4
    %v1395 = vadd.f32 %v1393, %v1394
    %v1396 = vrot.slane %v1395, 2
    %v1397 = vadd.f32 %v1395, %v1396
    %v1398 = vrot.slane %v1397, 1
    %v1399 = vadd.f32 %v1397, %v1398
    %v1400 = vadd.f32 %v286, %v288
    %v1401 = vadd.f32 %v1400, %v290
    %v1402 = vadd.f32 %v1401, %v292
    %v1403 = vadd.f32 %v1402, %v294
    %v1404 = vadd.f32 %v1403, %v296
    %v1405 = vadd.f32 %v1404, %v298
    %v1406 = vadd.f32 %v1405, %v300
    %v1407 = vadd.f32 %v1406, %v302
    %v1408 = vadd.f32 %v1407, %v304
    %v1409 = vadd.f32 %v1408, %v306
    %v1410 = vadd.f32 %v1409, %v308
    %v1411 = vadd.f32 %v1410, %v310
    %v1412 = vadd.f32 %v1411, %v312
    %v1413 = vadd.f32 %v1412, %v314
    %v1414 = vadd.f32 %v1413, %v316
    %v1415 = vadd.f32 %v1414, %v318
    %v1416 = vadd.f32 %v1415, %v320
    %v1417 = vadd.f32 %v1416, %v322
    %v1418 = vadd.f32 %v1417, %v324
    %v1419 = vadd.f32 %v1418, %v326
    %v1420 = vadd.f32 %v1419, %v328
    %v1421 = vadd.f32 %v1420, %v330
    %v1422 = vadd.f32 %v1421, %v332
    %v1423 = vadd.f32 %v1422, %v334
    %v1424 = vadd.f32 %v1423, %v336
    %v1425 = vadd.f32 %v1424, %v338
    %v1426 = vadd.f32 %v1425, %v340
    %v1427 = vadd.f32 %v1426, %v342
    %v1428 = vadd.f32 %v1427, %v344
    %v1429 = vadd.f32 %v1428, %v346
    %v1430 = vadd.f32 %v1429, %v348
    %v1431 = vadd.f32 %v1430, %v350
    %v1432 = vadd.f32 %v1431, %v352
    %v1433 = vadd.f32 %v1432, %v354
    %v1434 = vadd.f32 %v1433, %v356
    %v1435 = vadd.f32 %v1434, %v358
    %v1436 = vadd.f32 %v1435, %v360
    %v1437 = vadd.f32 %v1436, %v362
    %v1438 = vadd.f32 %v1437, %v364
    %v1439 = vadd.f32 %v1438, %v366
    %v1440 = vadd.f32 %v1439, %v368
    %v1441 = vadd.f32 %v1440, %v370
    %v1442 = vadd.f32 %v1441, %v372
    %v1443 = vadd.f32 %v1442, %v374
    %v1444 = vadd.f32 %v1443, %v376
    %v1445 = vadd.f32 %v1444, %v378
    %v1446 = vadd.f32 %v1445, %v380
    %v1447 = vadd.f32 %v1446, %v382
    %v1448 = vadd.f32 %v1447, %v384
    %v1449 = vadd.f32 %v1448, %v386
    %v1450 = vadd.f32 %v1449, %v388
    %v1451 = vadd.f32 %v1450, %v390
    %v1452 = vadd.f32 %v1451, %v392
    %v1453 = vadd.f32 %v1452, %v394
    %v1454 = vadd.f32 %v1453, %v396
    %v1455 = vadd.f32 %v1454, %v398
    %v1456 = vadd.f32 %v1455, %v400
    %v1457 = vadd.f32 %v1456, %v402
    %v1458 = vadd.f32 %v1457, %v404
    %v1459 = vadd.f32 %v1458, %v406
    %v1460 = vadd.f32 %v1459, %v408
    %v1461 = vadd.f32 %v1460, %v410
    %v1462 = vadd.f32 %v1461, %v412
    %v1463 = vrot.slane %v1462, 4
    %v1464 = vadd.f32 %v1462, %v1463
    %v1465 = vrot.slane %v1464, 2
    %v1466 = vadd.f32 %v1464, %v1465
    %v1467 = vrot.slane %v1466, 1
    %v1468 = vadd.f32 %v1466, %v1467
    %v1469 = vadd.f32 %v413, %v415
    %v1470 = vadd.f32 %v1469, %v417
    %v1471 = vadd.f32 %v1470, %v419
    %v1472 = vadd.f32 %v1471, %v421
    %v1473 = vadd.f32 %v1472, %v423
    %v1474 = vadd.f32 %v1473, %v425
    %v1475 = vadd.f32 %v1474, %v427
    %v1476 = vadd.f32 %v1475, %v429
    %v1477 = vadd.f32 %v1476, %v431
    %v1478 = vadd.f32 %v1477, %v433
    %v1479 = vadd.f32 %v1478, %v435
    %v1480 = vadd.f32 %v1479, %v437
    %v1481 = vadd.f32 %v1480, %v439
    %v1482 = vadd.f32 %v1481, %v441
    %v1483 = vadd.f32 %v1482, %v443
    %v1484 = vadd.f32 %v1483, %v445
    %v1485 = vadd.f32 %v1484, %v447
    %v1486 = vadd.f32 %v1485, %v449
    %v1487 = vadd.f32 %v1486, %v451
    %v1488 = vadd.f32 %v1487, %v453
    %v1489 = vadd.f32 %v1488, %v455
    %v1490 = vadd.f32 %v1489, %v457
    %v1491 = vadd.f32 %v1490, %v459
    %v1492 = vadd.f32 %v1491, %v461
    %v1493 = vadd.f32 %v1492, %v463
    %v1494 = vadd.f32 %v1493, %v465
    %v1495 = vadd.f32 %v1494, %v467
    %v1496 = vadd.f32 %v1495, %v469
    %v1497 = vadd.f32 %v1496, %v471
    %v1498 = vadd.f32 %v1497, %v473
    %v1499 = vadd.f32 %v1498, %v475
    %v1500 = vadd.f32 %v1499, %v477
    %v1501 = vadd.f32 %v1500, %v479
    %v1502 = vadd.f32 %v1501, %v481
    %v1503 = vadd.f32 %v1502, %v483
    %v1504 = vadd.f32 %v1503, %v485
    %v1505 = vadd.f32 %v1504, %v487
    %v1506 = vadd.f32 %v1505, %v489
    %v1507 = vadd.f32 %v1506, %v491
    %v1508 = vadd.f32 %v1507, %v493
    %v1509 = vadd.f32 %v1508, %v495
    %v1510 = vadd.f32 %v1509, %v497
    %v1511 = vadd.f32 %v1510, %v499
    %v1512 = vadd.f32 %v1511, %v501
    %v1513 = vadd.f32 %v1512, %v503
    %v1514 = vadd.f32 %v1513, %v505
    %v1515 = vadd.f32 %v1514, %v507
    %v1516 = vadd.f32 %v1515, %v509
    %v1517 = vadd.f32 %v1516, %v511
    %v1518 = vadd.f32 %v1517, %v513
    %v1519 = vadd.f32 %v1518, %v515
    %v1520 = vadd.f32 %v1519, %v517
    %v1521 = vadd.f32 %v1520, %v519
    %v1522 = vadd.f32 %v1521, %v521
    %v1523 = vadd.f32 %v1522, %v523
    %v1524 = vadd.f32 %v1523, %v525
    %v1525 = vadd.f32 %v1524, %v527
    %v1526 = vadd.f32 %v1525, %v529
    %v1527 = vadd.f32 %v1526, %v531
    %v1528 = vadd.f32 %v1527, %v533
    %v1529 = vadd.f32 %v1528, %v535
    %v1530 = vadd.f32 %v1529, %v537
    %v1531 = vadd.f32 %v1530, %v539
    %v1532 = vrot.slane %v1531, 4
    %v1533 = vadd.f32 %v1531, %v1532
    %v1534 = vrot.slane %v1533, 2
    %v1535 = vadd.f32 %v1533, %v1534
    %v1536 = vrot.slane %v1535, 1
    %v1537 = vadd.f32 %v1535, %v1536
    %v1538 = vadd.f32 %v414, %v416
    %v1539 = vadd.f32 %v1538, %v418
    %v1540 = vadd.f32 %v1539, %v420
    %v1541 = vadd.f32 %v1540, %v422
    %v1542 = vadd.f32 %v1541, %v424
    %v1543 = vadd.f32 %v1542, %v426
    %v1544 = vadd.f32 %v1543, %v428
    %v1545 = vadd.f32 %v1544, %v430
    %v1546 = vadd.f32 %v1545, %v432
    %v1547 = vadd.f32 %v1546, %v434
    %v1548 = vadd.f32 %v1547, %v436
    %v1549 = vadd.f32 %v1548, %v438
    %v1550 = vadd.f32 %v1549, %v440
    %v1551 = vadd.f32 %v1550, %v442
    %v1552 = vadd.f32 %v1551, %v444
    %v1553 = vadd.f32 %v1552, %v446
    %v1554 = vadd.f32 %v1553, %v448
    %v1555 = vadd.f32 %v1554, %v450
    %v1556 = vadd.f32 %v1555, %v452
    %v1557 = vadd.f32 %v1556, %v454
    %v1558 = vadd.f32 %v1557, %v456
    %v1559 = vadd.f32 %v1558, %v458
    %v1560 = vadd.f32 %v1559, %v460
    %v1561 = vadd.f32 %v1560, %v462
    %v1562 = vadd.f32 %v1561, %v464
    %v1563 = vadd.f32 %v1562, %v466
    %v1564 = vadd.f32 %v1563, %v468
    %v1565 = vadd.f32 %v1564, %v470
    %v1566 = vadd.f32 %v1565, %v472
    %v1567 = vadd.f32 %v1566, %v474
    %v1568 = vadd.f32 %v1567, %v476
    %v1569 = vadd.f32 %v1568, %v478
    %v1570 = vadd.f32 %v1569, %v480
    %v1571 = vadd.f32 %v1570, %v482
    %v1572 = vadd.f32 %v1571, %v484
    %v1573 = vadd.f32 %v1572, %v486
    %v1574 = vadd.f32 %v1573, %v488
    %v1575 = vadd.f32 %v1574, %v490
    %v1576 = vadd.f32 %v1575, %v492
    %v1577 = vadd.f32 %v1576, %v494
    %v1578 = vadd.f32 %v1577, %v496
    %v1579 = vadd.f32 %v1578, %v498
    %v1580 = vadd.f32 %v1579, %v500
    %v1581 = vadd.f32 %v1580, %v502
    %v1582 = vadd.f32 %v1581, %v504
    %v1583 = vadd.f32 %v1582, %v506
    %v1584 = vadd.f32 %v1583, %v508
    %v1585 = vadd.f32 %v1584, %v510
    %v1586 = vadd.f32 %v1585, %v512
    %v1587 = vadd.f32 %v1586, %v514
    %v1588 = vadd.f32 %v1587, %v516
    %v1589 = vadd.f32 %v1588, %v518
    %v1590 = vadd.f32 %v1589, %v520
    %v1591 = vadd.f32 %v1590, %v522
    %v1592 = vadd.f32 %v1591, %v524
    %v1593 = vadd.f32 %v1592, %v526
    %v1594 = vadd.f32 %v1593, %v528
    %v1595 = vadd.f32 %v1594, %v530
    %v1596 = vadd.f32 %v1595, %v532
    %v1597 = vadd.f32 %v1596, %v534
    %v1598 = vadd.f32 %v1597, %v536
    %v1599 = vadd.f32 %v1598, %v538
    %v1600 = vadd.f32 %v1599, %v540
    %v1601 = vrot.slane %v1600, 4
    %v1602 = vadd.f32 %v1600, %v1601
    %v1603 = vrot.slane %v1602, 2
    %v1604 = vadd.f32 %v1602, %v1603
    %v1605 = vrot.slane %v1604, 1
    %v1606 = vadd.f32 %v1604, %v1605
    %v1607 = vadd.f32 %v541, %v543
    %v1608 = vadd.f32 %v1607, %v545
    %v1609 = vadd.f32 %v1608, %v547
    %v1610 = vadd.f32 %v1609, %v549
    %v1611 = vadd.f32 %v1610, %v551
    %v1612 = vadd.f32 %v1611, %v553
    %v1613 = vadd.f32 %v1612, %v555
    %v1614 = vadd.f32 %v1613, %v557
    %v1615 = vadd.f32 %v1614, %v559
    %v1616 = vadd.f32 %v1615, %v561
    %v1617 = vadd.f32 %v1616, %v563
    %v1618 = vadd.f32 %v1617, %v565
    %v1619 = vadd.f32 %v1618, %v567
    %v1620 = vadd.f32 %v1619, %v569
    %v1621 = vadd.f32 %v1620, %v571
    %v1622 = vadd.f32 %v1621, %v573
    %v1623 = vadd.f32 %v1622, %v575
    %v1624 = vadd.f32 %v1623, %v577
    %v1625 = vadd.f32 %v1624, %v579
    %v1626 = vadd.f32 %v1625, %v581
    %v1627 = vadd.f32 %v1626, %v583
    %v1628 = vadd.f32 %v1627, %v585
    %v1629 = vadd.f32 %v1628, %v587
    %v1630 = vadd.f32 %v1629, %v589
    %v1631 = vadd.f32 %v1630, %v591
    %v1632 = vadd.f32 %v1631, %v593
    %v1633 = vadd.f32 %v1632, %v595
    %v1634 = vadd.f32 %v1633, %v597
    %v1635 = vadd.f32 %v1634, %v599
    %v1636 = vadd.f32 %v1635, %v601
    %v1637 = vadd.f32 %v1636, %v603
    %v1638 = vadd.f32 %v1637, %v605
    %v1639 = vadd.f32 %v1638, %v607
    %v1640 = vadd.f32 %v1639, %v609
    %v1641 = vadd.f32 %v1640, %v611
    %v1642 = vadd.f32 %v1641, %v613
    %v1643 = vadd.f32 %v1642, %v615
    %v1644 = vadd.f32 %v1643, %v617
    %v1645 = vadd.f32 %v1644, %v619
    %v1646 = vadd.f32 %v1645, %v621
    %v1647 = vadd.f32 %v1646, %v623
    %v1648 = vadd.f32 %v1647, %v625
    %v1649 = vadd.f32 %v1648, %v627
    %v1650 = vadd.f32 %v1649, %v629
    %v1651 = vadd.f32 %v1650, %v631
    %v1652 = vadd.f32 %v1651, %v633
    %v1653 = vadd.f32 %v1652, %v635
    %v1654 = vadd.f32 %v1653, %v637
    %v1655 = vadd.f32 %v1654, %v639
    %v1656 = vadd.f32 %v1655, %v641
    %v1657 = vadd.f32 %v1656, %v643
    %v1658 = vadd.f32 %v1657, %v645
    %v1659 = vadd.f32 %v1658, %v647
    %v1660 = vadd.f32 %v1659, %v649
    %v1661 = vadd.f32 %v1660, %v651
    %v1662 = vadd.f32 %v1661, %v653
    %v1663 = vadd.f32 %v1662, %v655
    %v1664 = vadd.f32 %v1663, %v657
    %v1665 = vadd.f32 %v1664, %v659
    %v1666 = vadd.f32 %v1665, %v661
    %v1667 = vadd.f32 %v1666, %v663
    %v1668 = vadd.f32 %v1667, %v665
    %v1669 = vadd.f32 %v1668, %v667
    %v1670 = vrot.slane %v1669, 4
    %v1671 = vadd.f32 %v1669, %v1670
    %v1672 = vrot.slane %v1671, 2
    %v1673 = vadd.f32 %v1671, %v1672
    %v1674 = vrot.slane %v1673, 1
    %v1675 = vadd.f32 %v1673, %v1674
    %v1676 = vadd.f32 %v542, %v544
    %v1677 = vadd.f32 %v1676, %v546
    %v1678 = vadd.f32 %v1677, %v548
    %v1679 = vadd.f32 %v1678, %v550
    %v1680 = vadd.f32 %v1679, %v552
    %v1681 = vadd.f32 %v1680, %v554
    %v1682 = vadd.f32 %v1681, %v556
    %v1683 = vadd.f32 %v1682, %v558
    %v1684 = vadd.f32 %v1683, %v560
    %v1685 = vadd.f32 %v1684, %v562
    %v1686 = vadd.f32 %v1685, %v564
    %v1687 = vadd.f32 %v1686, %v566
    %v1688 = vadd.f32 %v1687, %v568
    %v1689 = vadd.f32 %v1688, %v570
    %v1690 = vadd.f32 %v1689, %v572
    %v1691 = vadd.f32 %v1690, %v574
    %v1692 = vadd.f32 %v1691, %v576
    %v1693 = vadd.f32 %v1692, %v578
    %v1694 = vadd.f32 %v1693, %v580
    %v1695 = vadd.f32 %v1694, %v582
    %v1696 = vadd.f32 %v1695, %v584
    %v1697 = vadd.f32 %v1696, %v586
    %v1698 = vadd.f32 %v1697, %v588
    %v1699 = vadd.f32 %v1698, %v590
    %v1700 = vadd.f32 %v1699, %v592
    %v1701 = vadd.f32 %v1700, %v594
    %v1702 = vadd.f32 %v1701, %v596
    %v1703 = vadd.f32 %v1702, %v598
    %v1704 = vadd.f32 %v1703, %v600
    %v1705 = vadd.f32 %v1704, %v602
    %v1706 = vadd.f32 %v1705, %v604
    %v1707 = vadd.f32 %v1706, %v606
    %v1708 = vadd.f32 %v1707, %v608
    %v1709 = vadd.f32 %v1708, %v610
    %v1710 = vadd.f32 %v1709, %v612
    %v1711 = vadd.f32 %v1710, %v614
    %v1712 = vadd.f32 %v1711, %v616
    %v1713 = vadd.f32 %v1712, %v618
    %v1714 = vadd.f32 %v1713, %v620
    %v1715 = vadd.f32 %v1714, %v622
    %v1716 = vadd.f32 %v1715, %v624
    %v1717 = vadd.f32 %v1716, %v626
    %v1718 = vadd.f32 %v1717, %v628
    %v1719 = vadd.f32 %v1718, %v630
    %v1720 = vadd.f32 %v1719, %v632
    %v1721 = vadd.f32 %v1720, %v634
    %v1722 = vadd.f32 %v1721, %v636
    %v1723 = vadd.f32 %v1722, %v638
    %v1724 = vadd.f32 %v1723, %v640
    %v1725 = vadd.f32 %v1724, %v642
    %v1726 = vadd.f32 %v1725, %v644
    %v1727 = vadd.f32 %v1726, %v646
    %v1728 = vadd.f32 %v1727, %v648
    %v1729 = vadd.f32 %v1728, %v650
    %v1730 = vadd.f32 %v1729, %v652
    %v1731 = vadd.f32 %v1730, %v654
    %v1732 = vadd.f32 %v1731, %v656
    %v1733 = vadd.f32 %v1732, %v658
    %v1734 = vadd.f32 %v1733, %v660
    %v1735 = vadd.f32 %v1734, %v662
    %v1736 = vadd.f32 %v1735, %v664
    %v1737 = vadd.f32 %v1736, %v666
    %v1738 = vadd.f32 %v1737, %v668
    %v1739 = vrot.slane %v1738, 4
    %v1740 = vadd.f32 %v1738, %v1739
    %v1741 = vrot.slane %v1740, 2
    %v1742 = vadd.f32 %v1740, %v1741
    %v1743 = vrot.slane %v1742, 1
    %v1744 = vadd.f32 %v1742, %v1743
    %v1745 = vadd.f32 %v669, %v671
    %v1746 = vadd.f32 %v1745, %v673
    %v1747 = vadd.f32 %v1746, %v675
    %v1748 = vadd.f32 %v1747, %v677
    %v1749 = vadd.f32 %v1748, %v679
    %v1750 = vadd.f32 %v1749, %v681
    %v1751 = vadd.f32 %v1750, %v683
    %v1752 = vadd.f32 %v1751, %v685
    %v1753 = vadd.f32 %v1752, %v687
    %v1754 = vadd.f32 %v1753, %v689
    %v1755 = vadd.f32 %v1754, %v691
    %v1756 = vadd.f32 %v1755, %v693
    %v1757 = vadd.f32 %v1756, %v695
    %v1758 = vadd.f32 %v1757, %v697
    %v1759 = vadd.f32 %v1758, %v699
    %v1760 = vadd.f32 %v1759, %v701
    %v1761 = vadd.f32 %v1760, %v703
    %v1762 = vadd.f32 %v1761, %v705
    %v1763 = vadd.f32 %v1762, %v707
    %v1764 = vadd.f32 %v1763, %v709
    %v1765 = vadd.f32 %v1764, %v711
    %v1766 = vadd.f32 %v1765, %v713
    %v1767 = vadd.f32 %v1766, %v715
    %v1768 = vadd.f32 %v1767, %v717
    %v1769 = vadd.f32 %v1768, %v719
    %v1770 = vadd.f32 %v1769, %v721
    %v1771 = vadd.f32 %v1770, %v723
    %v1772 = vadd.f32 %v1771, %v725
    %v1773 = vadd.f32 %v1772, %v727
    %v1774 = vadd.f32 %v1773, %v729
    %v1775 = vadd.f32 %v1774, %v731
    %v1776 = vadd.f32 %v1775, %v733
    %v1777 = vadd.f32 %v1776, %v735
    %v1778 = vadd.f32 %v1777, %v737
    %v1779 = vadd.f32 %v1778, %v739
    %v1780 = vadd.f32 %v1779, %v741
    %v1781 = vadd.f32 %v1780, %v743
    %v1782 = vadd.f32 %v1781, %v745
    %v1783 = vadd.f32 %v1782, %v747
    %v1784 = vadd.f32 %v1783, %v749
    %v1785 = vadd.f32 %v1784, %v751
    %v1786 = vadd.f32 %v1785, %v753
    %v1787 = vadd.f32 %v1786, %v755
    %v1788 = vadd.f32 %v1787, %v757
    %v1789 = vadd.f32 %v1788, %v759
    %v1790 = vadd.f32 %v1789, %v761
    %v1791 = vadd.f32 %v1790, %v763
    %v1792 = vadd.f32 %v1791, %v765
    %v1793 = vadd.f32 %v1792, %v767
    %v1794 = vadd.f32 %v1793, %v769
    %v1795 = vadd.f32 %v1794, %v771
    %v1796 = vadd.f32 %v1795, %v773
    %v1797 = vadd.f32 %v1796, %v775
    %v1798 = vadd.f32 %v1797, %v777
    %v1799 = vadd.f32 %v1798, %v779
    %v1800 = vadd.f32 %v1799, %v781
    %v1801 = vadd.f32 %v1800, %v783
    %v1802 = vadd.f32 %v1801, %v785
    %v1803 = vadd.f32 %v1802, %v787
    %v1804 = vadd.f32 %v1803, %v789
    %v1805 = vadd.f32 %v1804, %v791
    %v1806 = vadd.f32 %v1805, %v793
    %v1807 = vadd.f32 %v1806, %v795
    %v1808 = vrot.slane %v1807, 4
    %v1809 = vadd.f32 %v1807, %v1808
    %v1810 = vrot.slane %v1809, 2
    %v1811 = vadd.f32 %v1809, %v1810
    %v1812 = vrot.slane %v1811, 1
    %v1813 = vadd.f32 %v1811, %v1812
    %v1814 = vadd.f32 %v670, %v672
    %v1815 = vadd.f32 %v1814, %v674
    %v1816 = vadd.f32 %v1815, %v676
    %v1817 = vadd.f32 %v1816, %v678
    %v1818 = vadd.f32 %v1817, %v680
    %v1819 = vadd.f32 %v1818, %v682
    %v1820 = vadd.f32 %v1819, %v684
    %v1821 = vadd.f32 %v1820, %v686
    %v1822 = vadd.f32 %v1821, %v688
    %v1823 = vadd.f32 %v1822, %v690
    %v1824 = vadd.f32 %v1823, %v692
    %v1825 = vadd.f32 %v1824, %v694
    %v1826 = vadd.f32 %v1825, %v696
    %v1827 = vadd.f32 %v1826, %v698
    %v1828 = vadd.f32 %v1827, %v700
    %v1829 = vadd.f32 %v1828, %v702
    %v1830 = vadd.f32 %v1829, %v704
    %v1831 = vadd.f32 %v1830, %v706
    %v1832 = vadd.f32 %v1831, %v708
    %v1833 = vadd.f32 %v1832, %v710
    %v1834 = vadd.f32 %v1833, %v712
    %v1835 = vadd.f32 %v1834, %v714
    %v1836 = vadd.f32 %v1835, %v716
    %v1837 = vadd.f32 %v1836, %v718
    %v1838 = vadd.f32 %v1837, %v720
    %v1839 = vadd.f32 %v1838, %v722
    %v1840 = vadd.f32 %v1839, %v724
    %v1841 = vadd.f32 %v1840, %v726
    %v1842 = vadd.f32 %v1841, %v728
    %v1843 = vadd.f32 %v1842, %v730
    %v1844 = vadd.f32 %v1843, %v732
    %v1845 = vadd.f32 %v1844, %v734
    %v1846 = vadd.f32 %v1845, %v736
    %v1847 = vadd.f32 %v1846, %v738
    %v1848 = vadd.f32 %v1847, %v740
    %v1849 = vadd.f32 %v1848, %v742
    %v1850 = vadd.f32 %v1849, %v744
    %v1851 = vadd.f32 %v1850, %v746
    %v1852 = vadd.f32 %v1851, %v748
    %v1853 = vadd.f32 %v1852, %v750
    %v1854 = vadd.f32 %v1853, %v752
    %v1855 = vadd.f32 %v1854, %v754
    %v1856 = vadd.f32 %v1855, %v756
    %v1857 = vadd.f32 %v1856, %v758
    %v1858 = vadd.f32 %v1857, %v760
    %v1859 = vadd.f32 %v1858, %v762
    %v1860 = vadd.f32 %v1859, %v764
    %v1861 = vadd.f32 %v1860, %v766
    %v1862 = vadd.f32 %v1861, %v768
    %v1863 = vadd.f32 %v1862, %v770
    %v1864 = vadd.f32 %v1863, %v772
    %v1865 = vadd.f32 %v1864, %v774
    %v1866 = vadd.f32 %v1865, %v776
    %v1867 = vadd.f32 %v1866, %v778
    %v1868 = vadd.f32 %v1867, %v780
    %v1869 = vadd.f32 %v1868, %v782
    %v1870 = vadd.f32 %v1869, %v784
    %v1871 = vadd.f32 %v1870, %v786
    %v1872 = vadd.f32 %v1871, %v788
    %v1873 = vadd.f32 %v1872, %v790
    %v1874 = vadd.f32 %v1873, %v792
    %v1875 = vadd.f32 %v1874, %v794
    %v1876 = vadd.f32 %v1875, %v796
    %v1877 = vrot.slane %v1876, 4
    %v1878 = vadd.f32 %v1876, %v1877
    %v1879 = vrot.slane %v1878, 2
    %v1880 = vadd.f32 %v1878, %v1879
    %v1881 = vrot.slane %v1880, 1
    %v1882 = vadd.f32 %v1880, %v1881
    %v1883 = vadd.f32 %v797, %v799
    %v1884 = vadd.f32 %v1883, %v801
    %v1885 = vadd.f32 %v1884, %v803
    %v1886 = vadd.f32 %v1885, %v805
    %v1887 = vadd.f32 %v1886, %v807
    %v1888 = vadd.f32 %v1887, %v809
    %v1889 = vadd.f32 %v1888, %v811
    %v1890 = vadd.f32 %v1889, %v813
    %v1891 = vadd.f32 %v1890, %v815
    %v1892 = vadd.f32 %v1891, %v817
    %v1893 = vadd.f32 %v1892, %v819
    %v1894 = vadd.f32 %v1893, %v821
    %v1895 = vadd.f32 %v1894, %v823
    %v1896 = vadd.f32 %v1895, %v825
    %v1897 = vadd.f32 %v1896, %v827
    %v1898 = vadd.f32 %v1897, %v829
    %v1899 = vadd.f32 %v1898, %v831
    %v1900 = vadd.f32 %v1899, %v833
    %v1901 = vadd.f32 %v1900, %v835
    %v1902 = vadd.f32 %v1901, %v837
    %v1903 = vadd.f32 %v1902, %v839
    %v1904 = vadd.f32 %v1903, %v841
    %v1905 = vadd.f32 %v1904, %v843
    %v1906 = vadd.f32 %v1905, %v845
    %v1907 = vadd.f32 %v1906, %v847
    %v1908 = vadd.f32 %v1907, %v849
    %v1909 = vadd.f32 %v1908, %v851
    %v1910 = vadd.f32 %v1909, %v853
    %v1911 = vadd.f32 %v1910, %v855
    %v1912 = vadd.f32 %v1911, %v857
    %v1913 = vadd.f32 %v1912, %v859
    %v1914 = vadd.f32 %v1913, %v861
    %v1915 = vadd.f32 %v1914, %v863
    %v1916 = vadd.f32 %v1915, %v865
    %v1917 = vadd.f32 %v1916, %v867
    %v1918 = vadd.f32 %v1917, %v869
    %v1919 = vadd.f32 %v1918, %v871
    %v1920 = vadd.f32 %v1919, %v873
    %v1921 = vadd.f32 %v1920, %v875
    %v1922 = vadd.f32 %v1921, %v877
    %v1923 = vadd.f32 %v1922, %v879
    %v1924 = vadd.f32 %v1923, %v881
    %v1925 = vadd.f32 %v1924, %v883
    %v1926 = vadd.f32 %v1925, %v885
    %v1927 = vadd.f32 %v1926, %v887
    %v1928 = vadd.f32 %v1927, %v889
    %v1929 = vadd.f32 %v1928, %v891
    %v1930 = vadd.f32 %v1929, %v893
    %v1931 = vadd.f32 %v1930, %v895
    %v1932 = vadd.f32 %v1931, %v897
    %v1933 = vadd.f32 %v1932, %v899
    %v1934 = vadd.f32 %v1933, %v901
    %v1935 = vadd.f32 %v1934, %v903
    %v1936 = vadd.f32 %v1935, %v905
    %v1937 = vadd.f32 %v1936, %v907
    %v1938 = vadd.f32 %v1937, %v909
    %v1939 = vadd.f32 %v1938, %v911
    %v1940 = vadd.f32 %v1939, %v913
    %v1941 = vadd.f32 %v1940, %v915
    %v1942 = vadd.f32 %v1941, %v917
    %v1943 = vadd.f32 %v1942, %v919
    %v1944 = vadd.f32 %v1943, %v921
    %v1945 = vadd.f32 %v1944, %v923
    %v1946 = vrot.slane %v1945, 4
    %v1947 = vadd.f32 %v1945, %v1946
    %v1948 = vrot.slane %v1947, 2
    %v1949 = vadd.f32 %v1947, %v1948
    %v1950 = vrot.slane %v1949, 1
    %v1951 = vadd.f32 %v1949, %v1950
    %v1952 = vadd.f32 %v798, %v800
    %v1953 = vadd.f32 %v1952, %v802
    %v1954 = vadd.f32 %v1953, %v804
    %v1955 = vadd.f32 %v1954, %v806
    %v1956 = vadd.f32 %v1955, %v808
    %v1957 = vadd.f32 %v1956, %v810
    %v1958 = vadd.f32 %v1957, %v812
    %v1959 = vadd.f32 %v1958, %v814
    %v1960 = vadd.f32 %v1959, %v816
    %v1961 = vadd.f32 %v1960, %v818
    %v1962 = vadd.f32 %v1961, %v820
    %v1963 = vadd.f32 %v1962, %v822
    %v1964 = vadd.f32 %v1963, %v824
    %v1965 = vadd.f32 %v1964, %v826
    %v1966 = vadd.f32 %v1965, %v828
    %v1967 = vadd.f32 %v1966, %v830
    %v1968 = vadd.f32 %v1967, %v832
    %v1969 = vadd.f32 %v1968, %v834
    %v1970 = vadd.f32 %v1969, %v836
    %v1971 = vadd.f32 %v1970, %v838
    %v1972 = vadd.f32 %v1971, %v840
    %v1973 = vadd.f32 %v1972, %v842
    %v1974 = vadd.f32 %v1973, %v844
    %v1975 = vadd.f32 %v1974, %v846
    %v1976 = vadd.f32 %v1975, %v848
    %v1977 = vadd.f32 %v1976, %v850
    %v1978 = vadd.f32 %v1977, %v852
    %v1979 = vadd.f32 %v1978, %v854
    %v1980 = vadd.f32 %v1979, %v856
    %v1981 = vadd.f32 %v1980, %v858
    %v1982 = vadd.f32 %v1981, %v860
    %v1983 = vadd.f32 %v1982, %v862
    %v1984 = vadd.f32 %v1983, %v864
    %v1985 = vadd.f32 %v1984, %v866
    %v1986 = vadd.f32 %v1985, %v868
    %v1987 = vadd.f32 %v1986, %v870
    %v1988 = vadd.f32 %v1987, %v872
    %v1989 = vadd.f32 %v1988, %v874
    %v1990 = vadd.f32 %v1989, %v876
    %v1991 = vadd.f32 %v1990, %v878
    %v1992 = vadd.f32 %v1991, %v880
    %v1993 = vadd.f32 %v1992, %v882
    %v1994 = vadd.f32 %v1993, %v884
    %v1995 = vadd.f32 %v1994, %v886
    %v1996 = vadd.f32 %v1995, %v888
    %v1997 = vadd.f32 %v1996, %v890
    %v1998 = vadd.f32 %v1997, %v892
    %v1999 = vadd.f32 %v1998, %v894
    %v2000 = vadd.f32 %v1999, %v896
    %v2001 = vadd.f32 %v2000, %v898
    %v2002 = vadd.f32 %v2001, %v900
    %v2003 = vadd.f32 %v2002, %v902
    %v2004 = vadd.f32 %v2003, %v904
    %v2005 = vadd.f32 %v2004, %v906
    %v2006 = vadd.f32 %v2005, %v908
    %v2007 = vadd.f32 %v2006, %v910
    %v2008 = vadd.f32 %v2007, %v912
    %v2009 = vadd.f32 %v2008, %v914
    %v2010 = vadd.f32 %v2009, %v916
    %v2011 = vadd.f32 %v2010, %v918
    %v2012 = vadd.f32 %v2011, %v920
    %v2013 = vadd.f32 %v2012, %v922
    %v2014 = vadd.f32 %v2013, %v924
    %v2015 = vrot.slane %v2014, 4
    %v2016 = vadd.f32 %v2014, %v2015
    %v2017 = vrot.slane %v2016, 2
    %v2018 = vadd.f32 %v2016, %v2017
    %v2019 = vrot.slane %v2018, 1
    %v2020 = vadd.f32 %v2018, %v2019
    %v2021 = vadd.f32 %v925, %v927
    %v2022 = vadd.f32 %v2021, %v929
    %v2023 = vadd.f32 %v2022, %v931
    %v2024 = vadd.f32 %v2023, %v933
    %v2025 = vadd.f32 %v2024, %v935
    %v2026 = vadd.f32 %v2025, %v937
    %v2027 = vadd.f32 %v2026, %v939
    %v2028 = vadd.f32 %v2027, %v941
    %v2029 = vadd.f32 %v2028, %v943
    %v2030 = vadd.f32 %v2029, %v945
    %v2031 = vadd.f32 %v2030, %v947
    %v2032 = vadd.f32 %v2031, %v949
    %v2033 = vadd.f32 %v2032, %v951
    %v2034 = vadd.f32 %v2033, %v953
    %v2035 = vadd.f32 %v2034, %v955
    %v2036 = vadd.f32 %v2035, %v957
    %v2037 = vadd.f32 %v2036, %v959
    %v2038 = vadd.f32 %v2037, %v961
    %v2039 = vadd.f32 %v2038, %v963
    %v2040 = vadd.f32 %v2039, %v965
    %v2041 = vadd.f32 %v2040, %v967
    %v2042 = vadd.f32 %v2041, %v969
    %v2043 = vadd.f32 %v2042, %v971
    %v2044 = vadd.f32 %v2043, %v973
    %v2045 = vadd.f32 %v2044, %v975
    %v2046 = vadd.f32 %v2045, %v977
    %v2047 = vadd.f32 %v2046, %v979
    %v2048 = vadd.f32 %v2047, %v981
    %v2049 = vadd.f32 %v2048, %v983
    %v2050 = vadd.f32 %v2049, %v985
    %v2051 = vadd.f32 %v2050, %v987
    %v2052 = vadd.f32 %v2051, %v989
    %v2053 = vadd.f32 %v2052, %v991
    %v2054 = vadd.f32 %v2053, %v993
    %v2055 = vadd.f32 %v2054, %v995
    %v2056 = vadd.f32 %v2055, %v997
    %v2057 = vadd.f32 %v2056, %v999
    %v2058 = vadd.f32 %v2057, %v1001
    %v2059 = vadd.f32 %v2058, %v1003
    %v2060 = vadd.f32 %v2059, %v1005
    %v2061 = vadd.f32 %v2060, %v1007
    %v2062 = vadd.f32 %v2061, %v1009
    %v2063 = vadd.f32 %v2062, %v1011
    %v2064 = vadd.f32 %v2063, %v1013
    %v2065 = vadd.f32 %v2064, %v1015
    %v2066 = vadd.f32 %v2065, %v1017
    %v2067 = vadd.f32 %v2066, %v1019
    %v2068 = vadd.f32 %v2067, %v1021
    %v2069 = vadd.f32 %v2068, %v1023
    %v2070 = vadd.f32 %v2069, %v1025
    %v2071 = vadd.f32 %v2070, %v1027
    %v2072 = vadd.f32 %v2071, %v1029
    %v2073 = vadd.f32 %v2072, %v1031
    %v2074 = vadd.f32 %v2073, %v1033
    %v2075 = vadd.f32 %v2074, %v1035
    %v2076 = vadd.f32 %v2075, %v1037
    %v2077 = vadd.f32 %v2076, %v1039
    %v2078 = vadd.f32 %v2077, %v1041
    %v2079 = vadd.f32 %v2078, %v1043
    %v2080 = vadd.f32 %v2079, %v1045
    %v2081 = vadd.f32 %v2080, %v1047
    %v2082 = vadd.f32 %v2081, %v1049
    %v2083 = vadd.f32 %v2082, %v1051
    %v2084 = vrot.slane %v2083, 4
    %v2085 = vadd.f32 %v2083, %v2084
    %v2086 = vrot.slane %v2085, 2
    %v2087 = vadd.f32 %v2085, %v2086
    %v2088 = vrot.slane %v2087, 1
    %v2089 = vadd.f32 %v2087, %v2088
    %v2090 = vadd.f32 %v926, %v928
    %v2091 = vadd.f32 %v2090, %v930
    %v2092 = vadd.f32 %v2091, %v932
    %v2093 = vadd.f32 %v2092, %v934
    %v2094 = vadd.f32 %v2093, %v936
    %v2095 = vadd.f32 %v2094, %v938
    %v2096 = vadd.f32 %v2095, %v940
    %v2097 = vadd.f32 %v2096, %v942
    %v2098 = vadd.f32 %v2097, %v944
    %v2099 = vadd.f32 %v2098, %v946
    %v2100 = vadd.f32 %v2099, %v948
    %v2101 = vadd.f32 %v2100, %v950
    %v2102 = vadd.f32 %v2101, %v952
    %v2103 = vadd.f32 %v2102, %v954
    %v2104 = vadd.f32 %v2103, %v956
    %v2105 = vadd.f32 %v2104, %v958
    %v2106 = vadd.f32 %v2105, %v960
    %v2107 = vadd.f32 %v2106, %v962
    %v2108 = vadd.f32 %v2107, %v964
    %v2109 = vadd.f32 %v2108, %v966
    %v2110 = vadd.f32 %v2109, %v968
    %v2111 = vadd.f32 %v2110, %v970
    %v2112 = vadd.f32 %v2111, %v972
    %v2113 = vadd.f32 %v2112, %v974
    %v2114 = vadd.f32 %v2113, %v976
    %v2115 = vadd.f32 %v2114, %v978
    %v2116 = vadd.f32 %v2115, %v980
    %v2117 = vadd.f32 %v2116, %v982
    %v2118 = vadd.f32 %v2117, %v984
    %v2119 = vadd.f32 %v2118, %v986
    %v2120 = vadd.f32 %v2119, %v988
    %v2121 = vadd.f32 %v2120, %v990
    %v2122 = vadd.f32 %v2121, %v992
    %v2123 = vadd.f32 %v2122, %v994
    %v2124 = vadd.f32 %v2123, %v996
    %v2125 = vadd.f32 %v2124, %v998
    %v2126 = vadd.f32 %v2125, %v1000
    %v2127 = vadd.f32 %v2126, %v1002
    %v2128 = vadd.f32 %v2127, %v1004
    %v2129 = vadd.f32 %v2128, %v1006
    %v2130 = vadd.f32 %v2129, %v1008
    %v2131 = vadd.f32 %v2130, %v1010
    %v2132 = vadd.f32 %v2131, %v1012
    %v2133 = vadd.f32 %v2132, %v1014
    %v2134 = vadd.f32 %v2133, %v1016
    %v2135 = vadd.f32 %v2134, %v1018
    %v2136 = vadd.f32 %v2135, %v1020
    %v2137 = vadd.f32 %v2136, %v1022
    %v2138 = vadd.f32 %v2137, %v1024
    %v2139 = vadd.f32 %v2138, %v1026
    %v2140 = vadd.f32 %v2139, %v1028
    %v2141 = vadd.f32 %v2140, %v1030
    %v2142 = vadd.f32 %v2141, %v1032
    %v2143 = vadd.f32 %v2142, %v1034
    %v2144 = vadd.f32 %v2143, %v1036
    %v2145 = vadd.f32 %v2144, %v1038
    %v2146 = vadd.f32 %v2145, %v1040
    %v2147 = vadd.f32 %v2146, %v1042
    %v2148 = vadd.f32 %v2147, %v1044
    %v2149 = vadd.f32 %v2148, %v1046
    %v2150 = vadd.f32 %v2149, %v1048
    %v2151 = vadd.f32 %v2150, %v1050
    %v2152 = vadd.f32 %v2151, %v1052
    %v2153 = vrot.slane %v2152, 4
    %v2154 = vadd.f32 %v2152, %v2153
    %v2155 = vrot.slane %v2154, 2
    %v2156 = vadd.f32 %v2154, %v2155
    %v2157 = vrot.slane %v2156, 1
    %v2158 = vadd.f32 %v2156, %v2157
    %vm2175 = vcmask 1041409
    %v2176 = vsel %vm2175, %v1261, %v1123
    %vm2177 = vcmask 1042434
    %v2178 = vsel %vm2177, %v1399, %v2176
    %vm2179 = vcmask 1043459
    %v2180 = vsel %vm2179, %v1537, %v2178
    %vm2181 = vcmask 1044484
    %v2182 = vsel %vm2181, %v1675, %v2180
    %vm2183 = vcmask 1045509
    %v2184 = vsel %vm2183, %v1813, %v2182
    %vm2185 = vcmask 1046534
    %v2186 = vsel %vm2185, %v1951, %v2184
    %vm2187 = vcmask 1047559
    %v2188 = vsel %vm2187, %v2089, %v2186
    %v2189 = vsel %vm2175, %v1330, %v1192
    %v2190 = vsel %vm2177, %v1468, %v2189
    %v2191 = vsel %vm2179, %v1606, %v2190
    %v2192 = vsel %vm2181, %v1744, %v2191
    %v2193 = vsel %vm2183, %v1882, %v2192
    %v2194 = vsel %vm2185, %v2020, %v2193
    %v2195 = vsel %vm2187, %v2158, %v2194
    %v2198 = vadd.f32 %v1053, %v2188
    %v2199 = vadd.f32 %v1054, %v2195
    %2200 = vst [vmem:[#allocation5] sm:$0xff] %v2198
    %2201 = vst [vmem:[#allocation5 + $0x8] sm:$0xff] %v2199
    // Predicated region
    $region14: #{tpu_custom_call.1} parent=1 // pred_check
      %p2202 = pneg %p23
    $region15: #{tpu_custom_call.1} parent=1 // pred_check_branch
      %2204 = sbr.rel (%p2202) target = $region17
    $region16: #{tpu_custom_call.1} parent=1 // pred_region
      %v2205 = vld [vmem:[#allocation5] sm:$0xff]
      %v2206 = vld [vmem:[#allocation5 + $0x8] sm:$0xff]
      %v2207 = vmul.f32 %v2205, 0.001953125
      %v2208 = vmul.f32 %v2206, 0.001953125
      %2209 = vst [vmem:[#allocation5] sm:$0xff] %v2207
      %2210 = vst [vmem:[#allocation5 + $0x8] sm:$0xff] %v2208
    $region17: #{tpu_custom_call.1} parent=1 // pred_fallthru
      _
    // Predicated region
    $region18: #{tpu_custom_call.1} parent=1 // pred_check
      _
    $region19: #{tpu_custom_call.1} parent=1 // pred_check_branch
      %2212 = sbr.rel (0) target = $region21
    $region20: #{tpu_custom_call.1} parent=1 // pred_region
      %s2214 = ssub.s32 256, 256
      %2215 = vsyncadd [#allocation4], %s2214
      %s2217 = sshll.u32 [#allocation5], 4
      %s2218 = int_to_ptr.vmem [resolvable:$true] %s2217
      %2220 = dma.vmem_to_hbm [thread:$0]  %s2218, 256, %s1, [#allocation4]
    $region21: #{tpu_custom_call.1} parent=1 // pred_fallthru
      _
    // Predicated region
    $region22: #{tpu_custom_call.1} parent=1 // pred_check
      _
    $region23: #{tpu_custom_call.1} parent=1 // pred_check_branch
      %2222 = sbr.rel (0) target = $region25
    $region24: #{tpu_custom_call.1} parent=1 // pred_region
      %2223 = dma.done [#allocation4], 256
    $region25: #{tpu_custom_call.1} parent=1 // pred_fallthru
      _
    %2224 = vsyncpa [#allocation3], 1
    %2225 = vsyncpa [#allocation4], 1

</llo_original>
